<compile_context>
chip_gen: v5e
topology: v5e:2x2
jax: 0.10.0
libtpu: 0.0.40
codegen_flags: <defaults>
</compile_context>

<pallas_src>
import numpy as np
import jax
import jax.numpy as jnp
from jax import lax
from jax.experimental import pallas as pl
from jax.experimental.pallas import tpu as pltpu

N_LOGIT_LANES = 128  # FC output padded to a full lane width (dense vst, no masked stores)


# ---------------------------------------------------------------------------
# Fused Pallas kernel (built per static config)
# ---------------------------------------------------------------------------
def _make_kernel(c3, pool_p):
    """conv1..3 + relu + 2x2 maxpool + fc for `block_n` images per grid step."""

    def conv_relu(x2, w_ref, b_row):
        # x2: (Hin, Win*Cin) bf16; w_ref: (3, Win*Cin, OW*Cout) bf16; b_row: (1, OW*Cout) f32
        oh = x2.shape[0] - 2
        acc = jnp.dot(x2[0:oh, :], w_ref[0], preferred_element_type=jnp.float32)
        acc = acc + jnp.dot(x2[1:oh + 1, :], w_ref[1], preferred_element_type=jnp.float32)
        acc = acc + jnp.dot(x2[2:oh + 2, :], w_ref[2], preferred_element_type=jnp.float32)
        return jnp.maximum(acc + b_row, 0.0)  # f32

    def kernel(x_ref, w1_ref, b1_ref, w2_ref, b2_ref, w3_ref, b3_ref,
               wfc_ref, bfc_ref, out_ref):
        block_n = x_ref.shape[0]
        b1 = b1_ref[...]
        b2 = b2_ref[...]
        b3 = b3_ref[...]
        bfc = bfc_ref[...]                                       # (1, 128) f32

        for b in range(block_n):                                 # static unroll
            x2 = x_ref[b]                                        # (H, W*Cin) bf16
            y = conv_relu(x2, w1_ref, b1)                        # (H-2, (W-2)*C1) f32
            y = conv_relu(y.astype(jnp.bfloat16), w2_ref, b2)    # (H-4, (W-4)*C2)
            y3 = conv_relu(y.astype(jnp.bfloat16), w3_ref, b3)   # (H-6, (W-6)*C3)

            # 2x2 / stride-2 max pool, column-pair half: max of lane l and lane l+c3
            # (adjacent w-groups).  Only the even-group lanes 2*wp*c3+c are meaningful;
            # the FC weight has zeros everywhere else, so no compaction matmul is needed.
            nc = y3.shape[1]
            colp = jnp.maximum(y3[:, :nc - c3], y3[:, c3:])      # (H-6, (W-6-1)*C3) f32

            # Row-pair max folded into the fused FC accumulation (pre-permuted weight).
            acc = bfc                                            # (1, 128) f32
            for hh in range(pool_p):
                pr = jnp.maximum(colp[2 * hh:2 * hh + 1, :],
                                 colp[2 * hh + 1:2 * hh + 2, :])  # (1, L) pooled row hh
                acc = acc + jnp.dot(pr, wfc_ref[hh],
                                    preferred_element_type=jnp.float32)
            out_ref[b] = acc                                     # (1, 128) lane-dense

    return kernel


# ---------------------------------------------------------------------------
# One-time host-side weight packing (hoisted out of the forward; jit-friendly)
# ---------------------------------------------------------------------------
def build_band(conv_w, win):
    """PyTorch conv weight (Co,Ci,3,3) -> (3, Win*Ci, OW*Co) banded matmul weights."""
    wc = np.asarray(conv_w)
    co, ci, kh_n, kw_n = wc.shape
    ow = win - kw_n + 1
    band = np.zeros((kh_n, win * ci, ow * co), np.float32)
    wt = np.transpose(wc, (2, 3, 1, 0))                          # (KH, KW, Ci, Co)
    for kh in range(kh_n):
        for kw in range(kw_n):
            for o in range(ow):
                wi = o + kw
                band[kh, wi * ci:(wi + 1) * ci, o * co:(o + 1) * co] = wt[kh, kw]
    return band


def build_fc_packed(fc_w, fc_b, pool_p, c3):
    """fc (5, c3*p*p) in torch flatten(C,H,W) order -> (p, L, 128) weight blocks.

    Block hh is dotted with the column-pair-maxed conv3 row-pair hh; the pooled value
    for (hh, wp, c) lives at lane 2*wp*c3 + c, all other lanes get zero weight.
    """
    fc_w = np.asarray(fc_w, np.float32)
    fc_b = np.asarray(fc_b, np.float32)
    n_out = fc_w.shape[0]
    L = (2 * pool_p - 1) * c3
    wfc = np.zeros((pool_p, L, N_LOGIT_LANES), np.float32)
    fcw = fc_w.reshape(n_out, c3, pool_p, pool_p)                # (o, c, h, wp)
    for wp in range(pool_p):
        blk = np.transpose(fcw[:, :, :, wp], (2, 1, 0))          # (h, c, o)
        wfc[:, 2 * wp * c3: 2 * wp * c3 + c3, :n_out] = blk
    bfc = np.zeros((1, N_LOGIT_LANES), np.float32)
    bfc[0, :n_out] = fc_b
    return jnp.asarray(wfc), jnp.asarray(bfc)


def pack_params(params, h, w):
    c3 = int(params["conv3_w"].shape[0])
    pool_p = (h - 6) // 2
    pk = {
        "w1": jnp.asarray(build_band(params["conv1_w"], w), jnp.bfloat16),
        "w2": jnp.asarray(build_band(params["conv2_w"], w - 2), jnp.bfloat16),
        "w3": jnp.asarray(build_band(params["conv3_w"], w - 4), jnp.bfloat16),
        "b1": jnp.asarray(np.tile(np.asarray(params["conv1_b"]), w - 2).reshape(1, -1),
                          jnp.float32),
        "b2": jnp.asarray(np.tile(np.asarray(params["conv2_b"]), w - 4).reshape(1, -1),
                          jnp.float32),
        "b3": jnp.asarray(np.tile(np.asarray(params["conv3_b"]), w - 6).reshape(1, -1),
                          jnp.float32),
        "c3": c3,
        "p": pool_p,
    }
    pk["wfc"], pk["bfc"] = build_fc_packed(params["fc_w"], params["fc_b"], pool_p, c3)
    return pk


# ---------------------------------------------------------------------------
# pallas_call wrapper + jitted forward
# ---------------------------------------------------------------------------
def deepcnn_call(x2d, pk):
    n, h, wc = x2d.shape
    c3, pool_p = pk["c3"], pk["p"]

    # Images per grid step: amortize per-step overhead at larger batch while keeping
    # >= 2 grid steps so the "parallel" batch axis can use both v7x TensorCores.
    block_n = 1
    for cand in (4, 2):
        if n % cand == 0 and n // cand >= 2:
            block_n = cand
            break

    kernel = _make_kernel(c3, pool_p)

    def full(a):
        return pl.BlockSpec(a.shape, lambda i, _nd=a.ndim: (0,) * _nd)

    out = pl.pallas_call(
        kernel,
        out_shape=jax.ShapeDtypeStruct((n, 1, N_LOGIT_LANES), jnp.float32),
        grid=(n // block_n,),
        in_specs=[pl.BlockSpec((block_n, h, wc), lambda i: (i, 0, 0)),
                  full(pk["w1"]), full(pk["b1"]),
                  full(pk["w2"]), full(pk["b2"]),
                  full(pk["w3"]), full(pk["b3"]),
                  full(pk["wfc"]), full(pk["bfc"])],
        out_specs=pl.BlockSpec((block_n, 1, N_LOGIT_LANES), lambda i: (i, 0, 0)),
        compiler_params=pltpu.CompilerParams(dimension_semantics=("parallel",)),
    )(x2d, pk["w1"], pk["b1"], pk["w2"], pk["b2"], pk["w3"], pk["b3"],
      pk["wfc"], pk["bfc"])
    return out[:, 0, :5]


def build_forward(params, h, w):
    """One-time packing; returns a jitted forward: x (N,3,H,W) f32 -> logits (N,5) f32."""
    pk = pack_params(params, h, w)

    @jax.jit
    def forward(x_nchw):
        n, cin = x_nchw.shape[0], x_nchw.shape[1]
        x2d = jnp.transpose(x_nchw, (0, 2, 3, 1)).reshape(n, h, w * cin)
        return deepcnn_call(x2d.astype(jnp.bfloat16), pk)

    return forward


# ---------------------------------------------------------------------------
# Parameters + pure-JAX reference (mirrors the PyTorch forward) for validation
# ---------------------------------------------------------------------------
def init_params(key, arr):
    c1, c2, c3 = arr[0], arr[1], arr[2]
    ks = jax.random.split(key, 8)
    feat = 12 * 12 * c3  # 'pool' variant of DeepCNN
    return {
        "conv1_w": 0.1 * jax.random.normal(ks[0], (c1, 3, 3, 3), jnp.float32),
        "conv1_b": 0.1 * jax.random.normal(ks[1], (c1,), jnp.float32),
        "conv2_w": 0.1 * jax.random.normal(ks[2], (c2, c1, 3, 3), jnp.float32),
        "conv2_b": 0.1 * jax.random.normal(ks[3], (c2,), jnp.float32),
        "conv3_w": 0.1 * jax.random.normal(ks[4], (c3, c2, 3, 3), jnp.float32),
        "conv3_b": 0.1 * jax.random.normal(ks[5], (c3,), jnp.float32),
        "fc_w": 0.05 * jax.random.normal(ks[6], (5, feat), jnp.float32),
        "fc_b": 0.05 * jax.random.normal(ks[7], (5,), jnp.float32),
    }


def reference_forward(x, p):
    def conv(z, wt, b):
        y = lax.conv_general_dilated(z, wt, (1, 1), "VALID",
                                     dimension_numbers=("NCHW", "OIHW", "NCHW"))
        return jax.nn.relu(y + b[None, :, None, None])

    y = conv(x, p["conv1_w"], p["conv1_b"])
    y = conv(y, p["conv2_w"], p["conv2_b"])
    y = conv(y, p["conv3_w"], p["conv3_b"])
    y = jnp.maximum(jnp.maximum(y[:, :, 0::2, 0::2], y[:, :, 0::2, 1::2]),
                    jnp.maximum(y[:, :, 1::2, 0::2], y[:, :, 1::2, 1::2]))
    y = y.reshape(y.shape[0], -1)
    return y @ jnp.transpose(p["fc_w"]) + p["fc_b"]


if __name__ == "__main__":
    # DeepCNN(arr=[4, 6, 8, 'pool']); 30x30 input so pooled spatial = 12 (matches 12*12*arr[2]).
    arr = [4, 6, 8, "pool"]
    H = W = 30
    key = jax.random.PRNGKey(0)
    kx, kp = jax.random.split(key)
    x = jax.random.normal(kx, (2, 3, H, W), jnp.float32)   # NCHW, like PyTorch
    params = init_params(kp, arr)

    forward = build_forward(params, H, W)   # one-time packing + jit
    out = jax.block_until_ready(forward(x))
    assert out.shape == (2, 5), out.shape

    ref = reference_forward(x, params)      # f32 reference
    err = float(jnp.max(jnp.abs(out - ref)))
    # bf16 MXU inputs for the conv matmuls (f32 accumulation) -> tolerance looser than pure f32.
    assert err < 2e-2, f"max abs error vs reference: {err}"
    print("KERNEL_OK")
</pallas_src>

<mosaic_0001>
module attributes {stable_mosaic.version = 11 : i64} {
  func.func @kernel(%arg0: i32, %arg1: memref<1x30x90xbf16, #tpu.memory_space<vmem>>, %arg2: memref<3x90x112xbf16, #tpu.memory_space<vmem>>, %arg3: memref<1x112xf32, #tpu.memory_space<vmem>>, %arg4: memref<3x112x156xbf16, #tpu.memory_space<vmem>>, %arg5: memref<1x156xf32, #tpu.memory_space<vmem>>, %arg6: memref<3x156x192xbf16, #tpu.memory_space<vmem>>, %arg7: memref<1x192xf32, #tpu.memory_space<vmem>>, %arg8: memref<12x184x128xf32, #tpu.memory_space<vmem>>, %arg9: memref<1x128xf32, #tpu.memory_space<vmem>>, %arg10: memref<1x1x128xf32, #tpu.memory_space<vmem>>) attributes {dimension_semantics = [#tpu.dimension_semantics<parallel>], iteration_bounds = array<i64: 2>, scalar_prefetch = 0 : i64, scratch_operands = 0 : i64, tpu.core_type = #tpu.core_type<tc>, window_params = [{transform_indices = @transform_0, window_bounds = array<i64: 1, 30, 90>}, {pipeline_mode = #tpu.pipeline_mode<synchronous>, transform_indices = @transform_1, window_bounds = array<i64: 3, 90, 112>}, {pipeline_mode = #tpu.pipeline_mode<synchronous>, transform_indices = @transform_2, window_bounds = array<i64: 1, 112>}, {pipeline_mode = #tpu.pipeline_mode<synchronous>, transform_indices = @transform_3, window_bounds = array<i64: 3, 112, 156>}, {pipeline_mode = #tpu.pipeline_mode<synchronous>, transform_indices = @transform_4, window_bounds = array<i64: 1, 156>}, {pipeline_mode = #tpu.pipeline_mode<synchronous>, transform_indices = @transform_5, window_bounds = array<i64: 3, 156, 192>}, {pipeline_mode = #tpu.pipeline_mode<synchronous>, transform_indices = @transform_6, window_bounds = array<i64: 1, 192>}, {pipeline_mode = #tpu.pipeline_mode<synchronous>, transform_indices = @transform_7, window_bounds = array<i64: 12, 184, 128>}, {pipeline_mode = #tpu.pipeline_mode<synchronous>, transform_indices = @transform_8, window_bounds = array<i64: 1, 128>}, {transform_indices = @transform_9, window_bounds = array<i64: 1, 1, 128>}]} {
    %c0 = arith.constant 0 : index
    %c0_0 = arith.constant 0 : index
    %0 = vector.load %arg3[%c0, %c0_0] : memref<1x112xf32, #tpu.memory_space<vmem>>, vector<1x112xf32>
    %c0_1 = arith.constant 0 : index
    %c0_2 = arith.constant 0 : index
    %1 = vector.load %arg5[%c0_1, %c0_2] : memref<1x156xf32, #tpu.memory_space<vmem>>, vector<1x156xf32>
    %c0_3 = arith.constant 0 : index
    %c0_4 = arith.constant 0 : index
    %2 = vector.load %arg7[%c0_3, %c0_4] : memref<1x192xf32, #tpu.memory_space<vmem>>, vector<1x192xf32>
    %c0_5 = arith.constant 0 : index
    %c0_6 = arith.constant 0 : index
    %3 = vector.load %arg9[%c0_5, %c0_6] : memref<1x128xf32, #tpu.memory_space<vmem>>, vector<1x128xf32>
    %c0_7 = arith.constant 0 : index
    %c0_8 = arith.constant 0 : index
    %c0_9 = arith.constant 0 : index
    %4 = vector.load %arg1[%c0_7, %c0_8, %c0_9] : memref<1x30x90xbf16, #tpu.memory_space<vmem>>, vector<1x30x90xbf16>
    %5 = vector.shape_cast %4 : vector<1x30x90xbf16> to vector<30x90xbf16>
    %6 = vector.extract_strided_slice %5 {offsets = [0, 0], sizes = [28, 90], strides = [1, 1]} : vector<30x90xbf16> to vector<28x90xbf16>
    %c0_10 = arith.constant 0 : index
    %c0_11 = arith.constant 0 : index
    %c0_12 = arith.constant 0 : index
    %7 = vector.load %arg2[%c0_10, %c0_11, %c0_12] : memref<3x90x112xbf16, #tpu.memory_space<vmem>>, vector<1x90x112xbf16>
    %8 = vector.shape_cast %7 : vector<1x90x112xbf16> to vector<90x112xbf16>
    %cst = arith.constant dense<0.000000e+00> : vector<28x112xf32>
    %9 = tpu.matmul %6, %8, %cst {dimension_numbers = #tpu.dot_dimension_numbers<[1], [0], [0], [1], [0, 0, 1, 1], [], []>} : vector<28x90xbf16>, vector<90x112xbf16>, vector<28x112xf32> -> vector<28x112xf32>
    %10 = vector.extract_strided_slice %5 {offsets = [1, 0], sizes = [28, 90], strides = [1, 1]} : vector<30x90xbf16> to vector<28x90xbf16>
    %c1 = arith.constant 1 : index
    %c0_13 = arith.constant 0 : index
    %c0_14 = arith.constant 0 : index
    %11 = vector.load %arg2[%c1, %c0_13, %c0_14] : memref<3x90x112xbf16, #tpu.memory_space<vmem>>, vector<1x90x112xbf16>
    %12 = vector.shape_cast %11 : vector<1x90x112xbf16> to vector<90x112xbf16>
    %cst_15 = arith.constant dense<0.000000e+00> : vector<28x112xf32>
    %13 = tpu.matmul %10, %12, %cst_15 {dimension_numbers = #tpu.dot_dimension_numbers<[1], [0], [0], [1], [0, 0, 1, 1], [], []>} : vector<28x90xbf16>, vector<90x112xbf16>, vector<28x112xf32> -> vector<28x112xf32>
    %14 = arith.addf %9, %13 : vector<28x112xf32>
    %15 = vector.extract_strided_slice %5 {offsets = [2, 0], sizes = [28, 90], strides = [1, 1]} : vector<30x90xbf16> to vector<28x90xbf16>
    %c2 = arith.constant 2 : index
    %c0_16 = arith.constant 0 : index
    %c0_17 = arith.constant 0 : index
    %16 = vector.load %arg2[%c2, %c0_16, %c0_17] : memref<3x90x112xbf16, #tpu.memory_space<vmem>>, vector<1x90x112xbf16>
    %17 = vector.shape_cast %16 : vector<1x90x112xbf16> to vector<90x112xbf16>
    %cst_18 = arith.constant dense<0.000000e+00> : vector<28x112xf32>
    %18 = tpu.matmul %15, %17, %cst_18 {dimension_numbers = #tpu.dot_dimension_numbers<[1], [0], [0], [1], [0, 0, 1, 1], [], []>} : vector<28x90xbf16>, vector<90x112xbf16>, vector<28x112xf32> -> vector<28x112xf32>
    %19 = arith.addf %14, %18 : vector<28x112xf32>
    %20 = vector.broadcast %0 : vector<1x112xf32> to vector<28x112xf32>
    %21 = arith.addf %19, %20 : vector<28x112xf32>
    %cst_19 = arith.constant 0.000000e+00 : f32
    %22 = vector.broadcast %cst_19 : f32 to vector<28x112xf32>
    %23 = arith.maximumf %21, %22 : vector<28x112xf32>
    %24 = arith.truncf %23 : vector<28x112xf32> to vector<28x112xbf16>
    %25 = vector.extract_strided_slice %24 {offsets = [0, 0], sizes = [26, 112], strides = [1, 1]} : vector<28x112xbf16> to vector<26x112xbf16>
    %c0_20 = arith.constant 0 : index
    %c0_21 = arith.constant 0 : index
    %c0_22 = arith.constant 0 : index
    %26 = vector.load %arg4[%c0_20, %c0_21, %c0_22] : memref<3x112x156xbf16, #tpu.memory_space<vmem>>, vector<1x112x156xbf16>
    %27 = vector.shape_cast %26 : vector<1x112x156xbf16> to vector<112x156xbf16>
    %cst_23 = arith.constant dense<0.000000e+00> : vector<26x156xf32>
    %28 = tpu.matmul %25, %27, %cst_23 {dimension_numbers = #tpu.dot_dimension_numbers<[1], [0], [0], [1], [0, 0, 1, 1], [], []>} : vector<26x112xbf16>, vector<112x156xbf16>, vector<26x156xf32> -> vector<26x156xf32>
    %29 = vector.extract_strided_slice %24 {offsets = [1, 0], sizes = [26, 112], strides = [1, 1]} : vector<28x112xbf16> to vector<26x112xbf16>
    %c1_24 = arith.constant 1 : index
    %c0_25 = arith.constant 0 : index
    %c0_26 = arith.constant 0 : index
    %30 = vector.load %arg4[%c1_24, %c0_25, %c0_26] : memref<3x112x156xbf16, #tpu.memory_space<vmem>>, vector<1x112x156xbf16>
    %31 = vector.shape_cast %30 : vector<1x112x156xbf16> to vector<112x156xbf16>
    %cst_27 = arith.constant dense<0.000000e+00> : vector<26x156xf32>
    %32 = tpu.matmul %29, %31, %cst_27 {dimension_numbers = #tpu.dot_dimension_numbers<[1], [0], [0], [1], [0, 0, 1, 1], [], []>} : vector<26x112xbf16>, vector<112x156xbf16>, vector<26x156xf32> -> vector<26x156xf32>
    %33 = arith.addf %28, %32 : vector<26x156xf32>
    %34 = vector.extract_strided_slice %24 {offsets = [2, 0], sizes = [26, 112], strides = [1, 1]} : vector<28x112xbf16> to vector<26x112xbf16>
    %c2_28 = arith.constant 2 : index
    %c0_29 = arith.constant 0 : index
    %c0_30 = arith.constant 0 : index
    %35 = vector.load %arg4[%c2_28, %c0_29, %c0_30] : memref<3x112x156xbf16, #tpu.memory_space<vmem>>, vector<1x112x156xbf16>
    %36 = vector.shape_cast %35 : vector<1x112x156xbf16> to vector<112x156xbf16>
    %cst_31 = arith.constant dense<0.000000e+00> : vector<26x156xf32>
    %37 = tpu.matmul %34, %36, %cst_31 {dimension_numbers = #tpu.dot_dimension_numbers<[1], [0], [0], [1], [0, 0, 1, 1], [], []>} : vector<26x112xbf16>, vector<112x156xbf16>, vector<26x156xf32> -> vector<26x156xf32>
    %38 = arith.addf %33, %37 : vector<26x156xf32>
    %39 = vector.broadcast %1 : vector<1x156xf32> to vector<26x156xf32>
    %40 = arith.addf %38, %39 : vector<26x156xf32>
    %cst_32 = arith.constant 0.000000e+00 : f32
    %41 = vector.broadcast %cst_32 : f32 to vector<26x156xf32>
    %42 = arith.maximumf %40, %41 : vector<26x156xf32>
    %43 = arith.truncf %42 : vector<26x156xf32> to vector<26x156xbf16>
    %44 = vector.extract_strided_slice %43 {offsets = [0, 0], sizes = [24, 156], strides = [1, 1]} : vector<26x156xbf16> to vector<24x156xbf16>
    %c0_33 = arith.constant 0 : index
    %c0_34 = arith.constant 0 : index
    %c0_35 = arith.constant 0 : index
    %45 = vector.load %arg6[%c0_33, %c0_34, %c0_35] : memref<3x156x192xbf16, #tpu.memory_space<vmem>>, vector<1x156x192xbf16>
    %46 = vector.shape_cast %45 : vector<1x156x192xbf16> to vector<156x192xbf16>
    %cst_36 = arith.constant dense<0.000000e+00> : vector<24x192xf32>
    %47 = tpu.matmul %44, %46, %cst_36 {dimension_numbers = #tpu.dot_dimension_numbers<[1], [0], [0], [1], [0, 0, 1, 1], [], []>} : vector<24x156xbf16>, vector<156x192xbf16>, vector<24x192xf32> -> vector<24x192xf32>
    %48 = vector.extract_strided_slice %43 {offsets = [1, 0], sizes = [24, 156], strides = [1, 1]} : vector<26x156xbf16> to vector<24x156xbf16>
    %c1_37 = arith.constant 1 : index
    %c0_38 = arith.constant 0 : index
    %c0_39 = arith.constant 0 : index
    %49 = vector.load %arg6[%c1_37, %c0_38, %c0_39] : memref<3x156x192xbf16, #tpu.memory_space<vmem>>, vector<1x156x192xbf16>
    %50 = vector.shape_cast %49 : vector<1x156x192xbf16> to vector<156x192xbf16>
    %cst_40 = arith.constant dense<0.000000e+00> : vector<24x192xf32>
    %51 = tpu.matmul %48, %50, %cst_40 {dimension_numbers = #tpu.dot_dimension_numbers<[1], [0], [0], [1], [0, 0, 1, 1], [], []>} : vector<24x156xbf16>, vector<156x192xbf16>, vector<24x192xf32> -> vector<24x192xf32>
    %52 = arith.addf %47, %51 : vector<24x192xf32>
    %53 = vector.extract_strided_slice %43 {offsets = [2, 0], sizes = [24, 156], strides = [1, 1]} : vector<26x156xbf16> to vector<24x156xbf16>
    %c2_41 = arith.constant 2 : index
    %c0_42 = arith.constant 0 : index
    %c0_43 = arith.constant 0 : index
    %54 = vector.load %arg6[%c2_41, %c0_42, %c0_43] : memref<3x156x192xbf16, #tpu.memory_space<vmem>>, vector<1x156x192xbf16>
    %55 = vector.shape_cast %54 : vector<1x156x192xbf16> to vector<156x192xbf16>
    %cst_44 = arith.constant dense<0.000000e+00> : vector<24x192xf32>
    %56 = tpu.matmul %53, %55, %cst_44 {dimension_numbers = #tpu.dot_dimension_numbers<[1], [0], [0], [1], [0, 0, 1, 1], [], []>} : vector<24x156xbf16>, vector<156x192xbf16>, vector<24x192xf32> -> vector<24x192xf32>
    %57 = arith.addf %52, %56 : vector<24x192xf32>
    %58 = vector.broadcast %2 : vector<1x192xf32> to vector<24x192xf32>
    %59 = arith.addf %57, %58 : vector<24x192xf32>
    %cst_45 = arith.constant 0.000000e+00 : f32
    %60 = vector.broadcast %cst_45 : f32 to vector<24x192xf32>
    %61 = arith.maximumf %59, %60 : vector<24x192xf32>
    %62 = vector.extract_strided_slice %61 {offsets = [0, 0], sizes = [24, 184], strides = [1, 1]} : vector<24x192xf32> to vector<24x184xf32>
    %63 = vector.extract_strided_slice %61 {offsets = [0, 8], sizes = [24, 184], strides = [1, 1]} : vector<24x192xf32> to vector<24x184xf32>
    %64 = arith.maximumf %62, %63 : vector<24x184xf32>
    %65 = vector.extract_strided_slice %64 {offsets = [0, 0], sizes = [1, 184], strides = [1, 1]} : vector<24x184xf32> to vector<1x184xf32>
    %66 = vector.extract_strided_slice %64 {offsets = [1, 0], sizes = [1, 184], strides = [1, 1]} : vector<24x184xf32> to vector<1x184xf32>
    %67 = arith.maximumf %65, %66 : vector<1x184xf32>
    %c0_46 = arith.constant 0 : index
    %c0_47 = arith.constant 0 : index
    %c0_48 = arith.constant 0 : index
    %68 = vector.load %arg8[%c0_46, %c0_47, %c0_48] : memref<12x184x128xf32, #tpu.memory_space<vmem>>, vector<1x184x128xf32>
    %69 = vector.shape_cast %68 : vector<1x184x128xf32> to vector<184x128xf32>
    %cst_49 = arith.constant dense<0.000000e+00> : vector<1x128xf32>
    %70 = tpu.matmul %67, %69, %cst_49 {dimension_numbers = #tpu.dot_dimension_numbers<[1], [0], [0], [1], [0, 0, 1, 1], [], []>} : vector<1x184xf32>, vector<184x128xf32>, vector<1x128xf32> -> vector<1x128xf32>
    %71 = arith.addf %3, %70 : vector<1x128xf32>
    %72 = vector.extract_strided_slice %64 {offsets = [2, 0], sizes = [1, 184], strides = [1, 1]} : vector<24x184xf32> to vector<1x184xf32>
    %73 = vector.extract_strided_slice %64 {offsets = [3, 0], sizes = [1, 184], strides = [1, 1]} : vector<24x184xf32> to vector<1x184xf32>
    %74 = arith.maximumf %72, %73 : vector<1x184xf32>
    %c1_50 = arith.constant 1 : index
    %c0_51 = arith.constant 0 : index
    %c0_52 = arith.constant 0 : index
    %75 = vector.load %arg8[%c1_50, %c0_51, %c0_52] : memref<12x184x128xf32, #tpu.memory_space<vmem>>, vector<1x184x128xf32>
    %76 = vector.shape_cast %75 : vector<1x184x128xf32> to vector<184x128xf32>
    %cst_53 = arith.constant dense<0.000000e+00> : vector<1x128xf32>
    %77 = tpu.matmul %74, %76, %cst_53 {dimension_numbers = #tpu.dot_dimension_numbers<[1], [0], [0], [1], [0, 0, 1, 1], [], []>} : vector<1x184xf32>, vector<184x128xf32>, vector<1x128xf32> -> vector<1x128xf32>
    %78 = arith.addf %71, %77 : vector<1x128xf32>
    %79 = vector.extract_strided_slice %64 {offsets = [4, 0], sizes = [1, 184], strides = [1, 1]} : vector<24x184xf32> to vector<1x184xf32>
    %80 = vector.extract_strided_slice %64 {offsets = [5, 0], sizes = [1, 184], strides = [1, 1]} : vector<24x184xf32> to vector<1x184xf32>
    %81 = arith.maximumf %79, %80 : vector<1x184xf32>
    %c2_54 = arith.constant 2 : index
    %c0_55 = arith.constant 0 : index
    %c0_56 = arith.constant 0 : index
    %82 = vector.load %arg8[%c2_54, %c0_55, %c0_56] : memref<12x184x128xf32, #tpu.memory_space<vmem>>, vector<1x184x128xf32>
    %83 = vector.shape_cast %82 : vector<1x184x128xf32> to vector<184x128xf32>
    %cst_57 = arith.constant dense<0.000000e+00> : vector<1x128xf32>
    %84 = tpu.matmul %81, %83, %cst_57 {dimension_numbers = #tpu.dot_dimension_numbers<[1], [0], [0], [1], [0, 0, 1, 1], [], []>} : vector<1x184xf32>, vector<184x128xf32>, vector<1x128xf32> -> vector<1x128xf32>
    %85 = arith.addf %78, %84 : vector<1x128xf32>
    %86 = vector.extract_strided_slice %64 {offsets = [6, 0], sizes = [1, 184], strides = [1, 1]} : vector<24x184xf32> to vector<1x184xf32>
    %87 = vector.extract_strided_slice %64 {offsets = [7, 0], sizes = [1, 184], strides = [1, 1]} : vector<24x184xf32> to vector<1x184xf32>
    %88 = arith.maximumf %86, %87 : vector<1x184xf32>
    %c3 = arith.constant 3 : index
    %c0_58 = arith.constant 0 : index
    %c0_59 = arith.constant 0 : index
    %89 = vector.load %arg8[%c3, %c0_58, %c0_59] : memref<12x184x128xf32, #tpu.memory_space<vmem>>, vector<1x184x128xf32>
    %90 = vector.shape_cast %89 : vector<1x184x128xf32> to vector<184x128xf32>
    %cst_60 = arith.constant dense<0.000000e+00> : vector<1x128xf32>
    %91 = tpu.matmul %88, %90, %cst_60 {dimension_numbers = #tpu.dot_dimension_numbers<[1], [0], [0], [1], [0, 0, 1, 1], [], []>} : vector<1x184xf32>, vector<184x128xf32>, vector<1x128xf32> -> vector<1x128xf32>
    %92 = arith.addf %85, %91 : vector<1x128xf32>
    %93 = vector.extract_strided_slice %64 {offsets = [8, 0], sizes = [1, 184], strides = [1, 1]} : vector<24x184xf32> to vector<1x184xf32>
    %94 = vector.extract_strided_slice %64 {offsets = [9, 0], sizes = [1, 184], strides = [1, 1]} : vector<24x184xf32> to vector<1x184xf32>
    %95 = arith.maximumf %93, %94 : vector<1x184xf32>
    %c4 = arith.constant 4 : index
    %c0_61 = arith.constant 0 : index
    %c0_62 = arith.constant 0 : index
    %96 = vector.load %arg8[%c4, %c0_61, %c0_62] : memref<12x184x128xf32, #tpu.memory_space<vmem>>, vector<1x184x128xf32>
    %97 = vector.shape_cast %96 : vector<1x184x128xf32> to vector<184x128xf32>
    %cst_63 = arith.constant dense<0.000000e+00> : vector<1x128xf32>
    %98 = tpu.matmul %95, %97, %cst_63 {dimension_numbers = #tpu.dot_dimension_numbers<[1], [0], [0], [1], [0, 0, 1, 1], [], []>} : vector<1x184xf32>, vector<184x128xf32>, vector<1x128xf32> -> vector<1x128xf32>
    %99 = arith.addf %92, %98 : vector<1x128xf32>
    %100 = vector.extract_strided_slice %64 {offsets = [10, 0], sizes = [1, 184], strides = [1, 1]} : vector<24x184xf32> to vector<1x184xf32>
    %101 = vector.extract_strided_slice %64 {offsets = [11, 0], sizes = [1, 184], strides = [1, 1]} : vector<24x184xf32> to vector<1x184xf32>
    %102 = arith.maximumf %100, %101 : vector<1x184xf32>
    %c5 = arith.constant 5 : index
    %c0_64 = arith.constant 0 : index
    %c0_65 = arith.constant 0 : index
    %103 = vector.load %arg8[%c5, %c0_64, %c0_65] : memref<12x184x128xf32, #tpu.memory_space<vmem>>, vector<1x184x128xf32>
    %104 = vector.shape_cast %103 : vector<1x184x128xf32> to vector<184x128xf32>
    %cst_66 = arith.constant dense<0.000000e+00> : vector<1x128xf32>
    %105 = tpu.matmul %102, %104, %cst_66 {dimension_numbers = #tpu.dot_dimension_numbers<[1], [0], [0], [1], [0, 0, 1, 1], [], []>} : vector<1x184xf32>, vector<184x128xf32>, vector<1x128xf32> -> vector<1x128xf32>
    %106 = arith.addf %99, %105 : vector<1x128xf32>
    %107 = vector.extract_strided_slice %64 {offsets = [12, 0], sizes = [1, 184], strides = [1, 1]} : vector<24x184xf32> to vector<1x184xf32>
    %108 = vector.extract_strided_slice %64 {offsets = [13, 0], sizes = [1, 184], strides = [1, 1]} : vector<24x184xf32> to vector<1x184xf32>
    %109 = arith.maximumf %107, %108 : vector<1x184xf32>
    %c6 = arith.constant 6 : index
    %c0_67 = arith.constant 0 : index
    %c0_68 = arith.constant 0 : index
    %110 = vector.load %arg8[%c6, %c0_67, %c0_68] : memref<12x184x128xf32, #tpu.memory_space<vmem>>, vector<1x184x128xf32>
    %111 = vector.shape_cast %110 : vector<1x184x128xf32> to vector<184x128xf32>
    %cst_69 = arith.constant dense<0.000000e+00> : vector<1x128xf32>
    %112 = tpu.matmul %109, %111, %cst_69 {dimension_numbers = #tpu.dot_dimension_numbers<[1], [0], [0], [1], [0, 0, 1, 1], [], []>} : vector<1x184xf32>, vector<184x128xf32>, vector<1x128xf32> -> vector<1x128xf32>
    %113 = arith.addf %106, %112 : vector<1x128xf32>
    %114 = vector.extract_strided_slice %64 {offsets = [14, 0], sizes = [1, 184], strides = [1, 1]} : vector<24x184xf32> to vector<1x184xf32>
    %115 = vector.extract_strided_slice %64 {offsets = [15, 0], sizes = [1, 184], strides = [1, 1]} : vector<24x184xf32> to vector<1x184xf32>
    %116 = arith.maximumf %114, %115 : vector<1x184xf32>
    %c7 = arith.constant 7 : index
    %c0_70 = arith.constant 0 : index
    %c0_71 = arith.constant 0 : index
    %117 = vector.load %arg8[%c7, %c0_70, %c0_71] : memref<12x184x128xf32, #tpu.memory_space<vmem>>, vector<1x184x128xf32>
    %118 = vector.shape_cast %117 : vector<1x184x128xf32> to vector<184x128xf32>
    %cst_72 = arith.constant dense<0.000000e+00> : vector<1x128xf32>
    %119 = tpu.matmul %116, %118, %cst_72 {dimension_numbers = #tpu.dot_dimension_numbers<[1], [0], [0], [1], [0, 0, 1, 1], [], []>} : vector<1x184xf32>, vector<184x128xf32>, vector<1x128xf32> -> vector<1x128xf32>
    %120 = arith.addf %113, %119 : vector<1x128xf32>
    %121 = vector.extract_strided_slice %64 {offsets = [16, 0], sizes = [1, 184], strides = [1, 1]} : vector<24x184xf32> to vector<1x184xf32>
    %122 = vector.extract_strided_slice %64 {offsets = [17, 0], sizes = [1, 184], strides = [1, 1]} : vector<24x184xf32> to vector<1x184xf32>
    %123 = arith.maximumf %121, %122 : vector<1x184xf32>
    %c8 = arith.constant 8 : index
    %c0_73 = arith.constant 0 : index
    %c0_74 = arith.constant 0 : index
    %124 = vector.load %arg8[%c8, %c0_73, %c0_74] : memref<12x184x128xf32, #tpu.memory_space<vmem>>, vector<1x184x128xf32>
    %125 = vector.shape_cast %124 : vector<1x184x128xf32> to vector<184x128xf32>
    %cst_75 = arith.constant dense<0.000000e+00> : vector<1x128xf32>
    %126 = tpu.matmul %123, %125, %cst_75 {dimension_numbers = #tpu.dot_dimension_numbers<[1], [0], [0], [1], [0, 0, 1, 1], [], []>} : vector<1x184xf32>, vector<184x128xf32>, vector<1x128xf32> -> vector<1x128xf32>
    %127 = arith.addf %120, %126 : vector<1x128xf32>
    %128 = vector.extract_strided_slice %64 {offsets = [18, 0], sizes = [1, 184], strides = [1, 1]} : vector<24x184xf32> to vector<1x184xf32>
    %129 = vector.extract_strided_slice %64 {offsets = [19, 0], sizes = [1, 184], strides = [1, 1]} : vector<24x184xf32> to vector<1x184xf32>
    %130 = arith.maximumf %128, %129 : vector<1x184xf32>
    %c9 = arith.constant 9 : index
    %c0_76 = arith.constant 0 : index
    %c0_77 = arith.constant 0 : index
    %131 = vector.load %arg8[%c9, %c0_76, %c0_77] : memref<12x184x128xf32, #tpu.memory_space<vmem>>, vector<1x184x128xf32>
    %132 = vector.shape_cast %131 : vector<1x184x128xf32> to vector<184x128xf32>
    %cst_78 = arith.constant dense<0.000000e+00> : vector<1x128xf32>
    %133 = tpu.matmul %130, %132, %cst_78 {dimension_numbers = #tpu.dot_dimension_numbers<[1], [0], [0], [1], [0, 0, 1, 1], [], []>} : vector<1x184xf32>, vector<184x128xf32>, vector<1x128xf32> -> vector<1x128xf32>
    %134 = arith.addf %127, %133 : vector<1x128xf32>
    %135 = vector.extract_strided_slice %64 {offsets = [20, 0], sizes = [1, 184], strides = [1, 1]} : vector<24x184xf32> to vector<1x184xf32>
    %136 = vector.extract_strided_slice %64 {offsets = [21, 0], sizes = [1, 184], strides = [1, 1]} : vector<24x184xf32> to vector<1x184xf32>
    %137 = arith.maximumf %135, %136 : vector<1x184xf32>
    %c10 = arith.constant 10 : index
    %c0_79 = arith.constant 0 : index
    %c0_80 = arith.constant 0 : index
    %138 = vector.load %arg8[%c10, %c0_79, %c0_80] : memref<12x184x128xf32, #tpu.memory_space<vmem>>, vector<1x184x128xf32>
    %139 = vector.shape_cast %138 : vector<1x184x128xf32> to vector<184x128xf32>
    %cst_81 = arith.constant dense<0.000000e+00> : vector<1x128xf32>
    %140 = tpu.matmul %137, %139, %cst_81 {dimension_numbers = #tpu.dot_dimension_numbers<[1], [0], [0], [1], [0, 0, 1, 1], [], []>} : vector<1x184xf32>, vector<184x128xf32>, vector<1x128xf32> -> vector<1x128xf32>
    %141 = arith.addf %134, %140 : vector<1x128xf32>
    %142 = vector.extract_strided_slice %64 {offsets = [22, 0], sizes = [1, 184], strides = [1, 1]} : vector<24x184xf32> to vector<1x184xf32>
    %143 = vector.extract_strided_slice %64 {offsets = [23, 0], sizes = [1, 184], strides = [1, 1]} : vector<24x184xf32> to vector<1x184xf32>
    %144 = arith.maximumf %142, %143 : vector<1x184xf32>
    %c11 = arith.constant 11 : index
    %c0_82 = arith.constant 0 : index
    %c0_83 = arith.constant 0 : index
    %145 = vector.load %arg8[%c11, %c0_82, %c0_83] : memref<12x184x128xf32, #tpu.memory_space<vmem>>, vector<1x184x128xf32>
    %146 = vector.shape_cast %145 : vector<1x184x128xf32> to vector<184x128xf32>
    %cst_84 = arith.constant dense<0.000000e+00> : vector<1x128xf32>
    %147 = tpu.matmul %144, %146, %cst_84 {dimension_numbers = #tpu.dot_dimension_numbers<[1], [0], [0], [1], [0, 0, 1, 1], [], []>} : vector<1x184xf32>, vector<184x128xf32>, vector<1x128xf32> -> vector<1x128xf32>
    %148 = arith.addf %141, %147 : vector<1x128xf32>
    %c0_85 = arith.constant 0 : index
    %c0_86 = arith.constant 0 : index
    %c0_87 = arith.constant 0 : index
    %149 = vector.load %arg10[%c0_85, %c0_86, %c0_87] : memref<1x1x128xf32, #tpu.memory_space<vmem>>, vector<1x1x128xf32>
    %150 = vector.shape_cast %149 : vector<1x1x128xf32> to vector<1x128xf32>
    %151 = vector.shape_cast %148 : vector<1x128xf32> to vector<1x1x128xf32>
    tpu.vector_store %arg10[%c0_85, %c0_86, %c0_87], %151 {strides = array<i32>} : memref<1x1x128xf32, #tpu.memory_space<vmem>>, vector<1x1x128xf32>,
    return
  }
  func.func @transform_0(%arg0: i32) -> (i32, i32, i32) {
    %c0_i32 = arith.constant 0 : i32
    %c0_i32_0 = arith.constant 0 : i32
    %c0_i32_1 = arith.constant 0 : i32
    return %arg0, %c0_i32, %c0_i32_0 : i32, i32, i32
  }
  func.func @transform_1(%arg0: i32) -> (i32, i32, i32) {
    %c0_i32 = arith.constant 0 : i32
    %c0_i32_0 = arith.constant 0 : i32
    %c0_i32_1 = arith.constant 0 : i32
    %c0_i32_2 = arith.constant 0 : i32
    return %c0_i32, %c0_i32_0, %c0_i32_1 : i32, i32, i32
  }
  func.func @transform_2(%arg0: i32) -> (i32, i32) {
    %c0_i32 = arith.constant 0 : i32
    %c0_i32_0 = arith.constant 0 : i32
    %c0_i32_1 = arith.constant 0 : i32
    return %c0_i32, %c0_i32_0 : i32, i32
  }
  func.func @transform_3(%arg0: i32) -> (i32, i32, i32) {
    %c0_i32 = arith.constant 0 : i32
    %c0_i32_0 = arith.constant 0 : i32
    %c0_i32_1 = arith.constant 0 : i32
    %c0_i32_2 = arith.constant 0 : i32
    return %c0_i32, %c0_i32_0, %c0_i32_1 : i32, i32, i32
  }
  func.func @transform_4(%arg0: i32) -> (i32, i32) {
    %c0_i32 = arith.constant 0 : i32
    %c0_i32_0 = arith.constant 0 : i32
    %c0_i32_1 = arith.constant 0 : i32
    return %c0_i32, %c0_i32_0 : i32, i32
  }
  func.func @transform_5(%arg0: i32) -> (i32, i32, i32) {
    %c0_i32 = arith.constant 0 : i32
    %c0_i32_0 = arith.constant 0 : i32
    %c0_i32_1 = arith.constant 0 : i32
    %c0_i32_2 = arith.constant 0 : i32
    return %c0_i32, %c0_i32_0, %c0_i32_1 : i32, i32, i32
  }
  func.func @transform_6(%arg0: i32) -> (i32, i32) {
    %c0_i32 = arith.constant 0 : i32
    %c0_i32_0 = arith.constant 0 : i32
    %c0_i32_1 = arith.constant 0 : i32
    return %c0_i32, %c0_i32_0 : i32, i32
  }
  func.func @transform_7(%arg0: i32) -> (i32, i32, i32) {
    %c0_i32 = arith.constant 0 : i32
    %c0_i32_0 = arith.constant 0 : i32
    %c0_i32_1 = arith.constant 0 : i32
    %c0_i32_2 = arith.constant 0 : i32
    return %c0_i32, %c0_i32_0, %c0_i32_1 : i32, i32, i32
  }
  func.func @transform_8(%arg0: i32) -> (i32, i32) {
    %c0_i32 = arith.constant 0 : i32
    %c0_i32_0 = arith.constant 0 : i32
    %c0_i32_1 = arith.constant 0 : i32
    return %c0_i32, %c0_i32_0 : i32, i32
  }
  func.func @transform_9(%arg0: i32) -> (i32, i32, i32) {
    %c0_i32 = arith.constant 0 : i32
    %c0_i32_0 = arith.constant 0 : i32
    %c0_i32_1 = arith.constant 0 : i32
    return %arg0, %c0_i32, %c0_i32_0 : i32, i32, i32
  }
}

</mosaic_0001>

<llo_original>
// kernel: forward.1
$region0: #{forward.1}
  #allocation0 [shape = 'u32[]', space=smem, size = 0x4, offset = 0x4, fixed_abs, tag = 'smem constant byte address 0x4 - core index']
  #allocation1 [shape = 'u32[72,128]{1,0:T(1,128)}', space=vmem, size = 0x9000, scoped, tag = 'internal scratch']
  %s0 = inlined_call_operand.vmem [shape: bf16[2,30,90], index: 0, kind: input, shape index: {}]
  %s1 = inlined_call_operand.hbm [shape: bf16[3,90,112], index: 1, kind: input, shape index: {}]
  %s2 = inlined_call_operand.hbm [shape: f32[1,112], index: 2, kind: input, shape index: {}]
  %s3 = inlined_call_operand.hbm [shape: bf16[3,112,156], index: 3, kind: input, shape index: {}]
  %s4 = inlined_call_operand.hbm [shape: f32[1,156], index: 4, kind: input, shape index: {}]
  %s5 = inlined_call_operand.hbm [shape: bf16[3,156,192], index: 5, kind: input, shape index: {}]
  %s6 = inlined_call_operand.hbm [shape: f32[1,192], index: 6, kind: input, shape index: {}]
  %s7 = inlined_call_operand.hbm [shape: f32[12,184,128], index: 7, kind: input, shape index: {}]
  %s8 = inlined_call_operand.hbm [shape: f32[1,128], index: 8, kind: input, shape index: {}]
  %s9 = inlined_call_operand.hbm [shape: f32[2,1,128], index: 9, kind: output, shape index: {}]
  %s10 = sld [smem:[#allocation0]]
  $region101: #{forward.1} parent=0
    _
  %s12 = ssub.s32 1, %s10
  %s13 = scalar_select 0, %s12, %s10
  $region1: #{forward.1} parent=0
    #allocation2 [shape = 'u8[73728]{0}', space=vmem, size = 0x12000, scoped, tag = 'input window, operand 1, single buffered']
    #allocation3 [shape = 's32[2]{0}', space=sflag, size = 0x8, scoped, tag = 'scoped memory for forward.1']
    #allocation4 [shape = 's32[2]{0}', space=sflag, size = 0x8, scoped, tag = 'scoped memory for forward.1']
    #allocation5 [shape = 'u8[512]{0}', space=vmem, size = 0x400, scoped, tag = 'input window, operand 2, single buffered']
    #allocation6 [shape = 's32[1]{0}', space=sflag, size = 0x4, scoped, tag = 'scoped memory for forward.1']
    #allocation7 [shape = 'u8[172032]{0}', space=vmem, size = 0x2a000, scoped, tag = 'input window, operand 3, single buffered']
    #allocation8 [shape = 'u8[1024]{0}', space=vmem, size = 0x400, scoped, tag = 'input window, operand 4, single buffered']
    #allocation9 [shape = 's32[1]{0}', space=sflag, size = 0x4, scoped, tag = 'scoped memory for forward.1']
    #allocation10 [shape = 'u8[245760]{0}', space=vmem, size = 0x3c000, scoped, tag = 'input window, operand 5, single buffered']
    #allocation11 [shape = 'u8[1024]{0}', space=vmem, size = 0x400, scoped, tag = 'input window, operand 6, single buffered']
    #allocation12 [shape = 's32[1]{0}', space=sflag, size = 0x4, scoped, tag = 'scoped memory for forward.1']
    #allocation13 [shape = 'u8[1130496]{0}', space=vmem, size = 0x114000, scoped, tag = 'input window, operand 7, single buffered']
    #allocation14 [shape = 'u8[512]{0}', space=vmem, size = 0x400, scoped, tag = 'input window, operand 8, single buffered']
    #allocation15 [shape = 's32[1]{0}', space=sflag, size = 0x4, scoped, tag = 'scoped memory for forward.1']
    #allocation16 [shape = 'u8[1024]{0}', space=vmem, size = 0x400, scoped, tag = 'output window, operand 0']
    %14 = vsyncpa [#allocation3], 0
    %15 = vsyncpa [#allocation6], 0
    %16 = vsyncpa [#allocation9], 0
    %17 = vsyncpa [#allocation12], 0
    %18 = vsyncpa [#allocation15], 0
    %19 = vsyncpa [#allocation4], 0
    %s20 = scalar_lea.sflag [#allocation4], 1
    %21 = vsyncpa %s20, 0
    loop: start=0, step=1, limit=4
    $region2: #{forward.1} parent=1 // loop_pre_header
      _
    $region3: #{forward.1} parent=1 // loop_header
      %s23 = sphi 0, %s27
      %p24 = scmp.ge.s32.totalorder %s23, 4
      %s33 = sphi 0, %s35
      %s36 = sphi 0, %s33
      %s37 = sphi 0, %s36
      %s53 = sphi 0, %s37
      %s57 = sphi 0, %s57
      %s59 = sphi 0, %s57
      %s60 = sphi 0, %s59
      %s74 = sphi 0, %s60
      %s78 = sphi 0, %s78
      %s80 = sphi 0, %s78
      %s81 = sphi 0, %s80
      %s95 = sphi 0, %s81
      %s99 = sphi 0, %s99
      %s101 = sphi 0, %s99
      %s102 = sphi 0, %s101
      %s116 = sphi 0, %s102
      %s120 = sphi 0, %s120
      %s122 = sphi 0, %s120
      %s123 = sphi 0, %s122
      %s137 = sphi 0, %s123
      %s141 = sphi 0, %s141
      %s143 = sphi 0, %s141
      %s144 = sphi 0, %s143
      %s158 = sphi 0, %s144
      %s162 = sphi 0, %s162
      %s164 = sphi 0, %s162
      %s165 = sphi 0, %s164
      %s179 = sphi 0, %s165
      %s183 = sphi 0, %s183
      %s185 = sphi 0, %s183
      %s186 = sphi 0, %s185
      %s200 = sphi 0, %s186
      %s204 = sphi 0, %s204
      %s206 = sphi 0, %s204
      %s207 = sphi 0, %s206
      %s221 = sphi 0, %s207
      %s227 = sphi 0, %s229
      %s230 = sphi 0, %s227
      %s231 = sphi 0, %s230
      %s247 = sphi 0, %s231
    $region4: #{forward.1} parent=1 // loop_header_branch
      %26 = sbr.rel (%p24) target = $region8
    $region5: #{forward.1} parent=1 // loop_body
      %s28 = ssub.s32 %s23, 1
      %s29 = ssub.s32 %s23, 2
      %s30 = sadd.s32 %s23, 1
      %s31 = ssub.s32 %s23, %s30
      %p32 = scmp.eq.s32.totalorder %s31, 0
      %s34 = sadd.s32 %s33, 1
      %s35 = scalar_select %p32, %s33, %s34
      %p38 = pneg %p32
      %p39 = scmp.eq.s32.totalorder %s23, 1
      %p40 = por %p38, %p39
      %p41 = scmp.ne.s32.totalorder %s33, %s36
      %p42 = scmp.eq.s32.totalorder %s23, 0
      %p43 = por %p41, %p42
      %p44 = scmp.ne.s32.totalorder %s33, %s36
      %p45 = scmp.eq.s32.totalorder %s28, 1
      %p46 = por %p44, %p45
      %p47 = scmp.ne.s32.totalorder %s36, %s37
      %p48 = scmp.eq.s32.totalorder %s28, 0
      %p49 = por %p47, %p48
      %p50 = scmp.ne.s32.totalorder %s36, %s37
      %p51 = scmp.eq.s32.totalorder %s29, 1
      %p52 = por %p50, %p51
      %p54 = scmp.ne.s32.totalorder %s37, %s53
      %p55 = scmp.eq.s32.totalorder %s29, 0
      %p56 = por %p54, %p55
      %s58 = sadd.s32 %s57, 1
      %p61 = scmp.eq.s32.totalorder %s23, 1
      %p62 = scmp.ne.s32.totalorder %s57, %s59
      %p63 = scmp.eq.s32.totalorder %s23, 0
      %p64 = por %p62, %p63
      %p65 = scmp.ne.s32.totalorder %s57, %s59
      %p66 = scmp.eq.s32.totalorder %s28, 1
      %p67 = por %p65, %p66
      %p68 = scmp.ne.s32.totalorder %s59, %s60
      %p69 = scmp.eq.s32.totalorder %s28, 0
      %p70 = por %p68, %p69
      %p71 = scmp.ne.s32.totalorder %s59, %s60
      %p72 = scmp.eq.s32.totalorder %s29, 1
      %p73 = por %p71, %p72
      %p75 = scmp.ne.s32.totalorder %s60, %s74
      %p76 = scmp.eq.s32.totalorder %s29, 0
      %p77 = por %p75, %p76
      %s79 = sadd.s32 %s78, 1
      %p82 = scmp.eq.s32.totalorder %s23, 1
      %p83 = scmp.ne.s32.totalorder %s78, %s80
      %p84 = scmp.eq.s32.totalorder %s23, 0
      %p85 = por %p83, %p84
      %p86 = scmp.ne.s32.totalorder %s78, %s80
      %p87 = scmp.eq.s32.totalorder %s28, 1
      %p88 = por %p86, %p87
      %p89 = scmp.ne.s32.totalorder %s80, %s81
      %p90 = scmp.eq.s32.totalorder %s28, 0
      %p91 = por %p89, %p90
      %p92 = scmp.ne.s32.totalorder %s80, %s81
      %p93 = scmp.eq.s32.totalorder %s29, 1
      %p94 = por %p92, %p93
      %p96 = scmp.ne.s32.totalorder %s81, %s95
      %p97 = scmp.eq.s32.totalorder %s29, 0
      %p98 = por %p96, %p97
      %s100 = sadd.s32 %s99, 1
      %p103 = scmp.eq.s32.totalorder %s23, 1
      %p104 = scmp.ne.s32.totalorder %s99, %s101
      %p105 = scmp.eq.s32.totalorder %s23, 0
      %p106 = por %p104, %p105
      %p107 = scmp.ne.s32.totalorder %s99, %s101
      %p108 = scmp.eq.s32.totalorder %s28, 1
      %p109 = por %p107, %p108
      %p110 = scmp.ne.s32.totalorder %s101, %s102
      %p111 = scmp.eq.s32.totalorder %s28, 0
      %p112 = por %p110, %p111
      %p113 = scmp.ne.s32.totalorder %s101, %s102
      %p114 = scmp.eq.s32.totalorder %s29, 1
      %p115 = por %p113, %p114
      %p117 = scmp.ne.s32.totalorder %s102, %s116
      %p118 = scmp.eq.s32.totalorder %s29, 0
      %p119 = por %p117, %p118
      %s121 = sadd.s32 %s120, 1
      %p124 = scmp.eq.s32.totalorder %s23, 1
      %p125 = scmp.ne.s32.totalorder %s120, %s122
      %p126 = scmp.eq.s32.totalorder %s23, 0
      %p127 = por %p125, %p126
      %p128 = scmp.ne.s32.totalorder %s120, %s122
      %p129 = scmp.eq.s32.totalorder %s28, 1
      %p130 = por %p128, %p129
      %p131 = scmp.ne.s32.totalorder %s122, %s123
      %p132 = scmp.eq.s32.totalorder %s28, 0
      %p133 = por %p131, %p132
      %p134 = scmp.ne.s32.totalorder %s122, %s123
      %p135 = scmp.eq.s32.totalorder %s29, 1
      %p136 = por %p134, %p135
      %p138 = scmp.ne.s32.totalorder %s123, %s137
      %p139 = scmp.eq.s32.totalorder %s29, 0
      %p140 = por %p138, %p139
      %s142 = sadd.s32 %s141, 1
      %p145 = scmp.eq.s32.totalorder %s23, 1
      %p146 = scmp.ne.s32.totalorder %s141, %s143
      %p147 = scmp.eq.s32.totalorder %s23, 0
      %p148 = por %p146, %p147
      %p149 = scmp.ne.s32.totalorder %s141, %s143
      %p150 = scmp.eq.s32.totalorder %s28, 1
      %p151 = por %p149, %p150
      %p152 = scmp.ne.s32.totalorder %s143, %s144
      %p153 = scmp.eq.s32.totalorder %s28, 0
      %p154 = por %p152, %p153
      %p155 = scmp.ne.s32.totalorder %s143, %s144
      %p156 = scmp.eq.s32.totalorder %s29, 1
      %p157 = por %p155, %p156
      %p159 = scmp.ne.s32.totalorder %s144, %s158
      %p160 = scmp.eq.s32.totalorder %s29, 0
      %p161 = por %p159, %p160
      %s163 = sadd.s32 %s162, 1
      %p166 = scmp.eq.s32.totalorder %s23, 1
      %p167 = scmp.ne.s32.totalorder %s162, %s164
      %p168 = scmp.eq.s32.totalorder %s23, 0
      %p169 = por %p167, %p168
      %p170 = scmp.ne.s32.totalorder %s162, %s164
      %p171 = scmp.eq.s32.totalorder %s28, 1
      %p172 = por %p170, %p171
      %p173 = scmp.ne.s32.totalorder %s164, %s165
      %p174 = scmp.eq.s32.totalorder %s28, 0
      %p175 = por %p173, %p174
      %p176 = scmp.ne.s32.totalorder %s164, %s165
      %p177 = scmp.eq.s32.totalorder %s29, 1
      %p178 = por %p176, %p177
      %p180 = scmp.ne.s32.totalorder %s165, %s179
      %p181 = scmp.eq.s32.totalorder %s29, 0
      %p182 = por %p180, %p181
      %s184 = sadd.s32 %s183, 1
      %p187 = scmp.eq.s32.totalorder %s23, 1
      %p188 = scmp.ne.s32.totalorder %s183, %s185
      %p189 = scmp.eq.s32.totalorder %s23, 0
      %p190 = por %p188, %p189
      %p191 = scmp.ne.s32.totalorder %s183, %s185
      %p192 = scmp.eq.s32.totalorder %s28, 1
      %p193 = por %p191, %p192
      %p194 = scmp.ne.s32.totalorder %s185, %s186
      %p195 = scmp.eq.s32.totalorder %s28, 0
      %p196 = por %p194, %p195
      %p197 = scmp.ne.s32.totalorder %s185, %s186
      %p198 = scmp.eq.s32.totalorder %s29, 1
      %p199 = por %p197, %p198
      %p201 = scmp.ne.s32.totalorder %s186, %s200
      %p202 = scmp.eq.s32.totalorder %s29, 0
      %p203 = por %p201, %p202
      %s205 = sadd.s32 %s204, 1
      %p208 = scmp.eq.s32.totalorder %s23, 1
      %p209 = scmp.ne.s32.totalorder %s204, %s206
      %p210 = scmp.eq.s32.totalorder %s23, 0
      %p211 = por %p209, %p210
      %p212 = scmp.ne.s32.totalorder %s204, %s206
      %p213 = scmp.eq.s32.totalorder %s28, 1
      %p214 = por %p212, %p213
      %p215 = scmp.ne.s32.totalorder %s206, %s207
      %p216 = scmp.eq.s32.totalorder %s28, 0
      %p217 = por %p215, %p216
      %p218 = scmp.ne.s32.totalorder %s206, %s207
      %p219 = scmp.eq.s32.totalorder %s29, 1
      %p220 = por %p218, %p219
      %p222 = scmp.ne.s32.totalorder %s207, %s221
      %p223 = scmp.eq.s32.totalorder %s29, 0
      %p224 = por %p222, %p223
      %s225 = ssub.s32 %s23, %s30
      %p226 = scmp.eq.s32.totalorder %s225, 0
      %s228 = sadd.s32 %s227, 1
      %s229 = scalar_select %p226, %s227, %s228
      %p232 = pneg %p226
      %p233 = scmp.eq.s32.totalorder %s23, 1
      %p234 = por %p232, %p233
      %p235 = scmp.ne.s32.totalorder %s227, %s230
      %p236 = scmp.eq.s32.totalorder %s23, 0
      %p237 = por %p235, %p236
      %p238 = scmp.ne.s32.totalorder %s227, %s230
      %p239 = scmp.eq.s32.totalorder %s28, 1
      %p240 = por %p238, %p239
      %p241 = scmp.ne.s32.totalorder %s230, %s231
      %p242 = scmp.eq.s32.totalorder %s28, 0
      %p243 = por %p241, %p242
      %p244 = scmp.ne.s32.totalorder %s230, %s231
      %p245 = scmp.eq.s32.totalorder %s29, 1
      %p246 = por %p244, %p245
      %p248 = scmp.ne.s32.totalorder %s231, %s247
      %p249 = scmp.eq.s32.totalorder %s29, 0
      %p250 = por %p248, %p249
      %p251 = scmp.le.s32.totalorder 1, %s23
      %p252 = scmp.lt.s32.totalorder %s23, 3
      %p253 = pnand %p251, %p252
      %p254 = pneg %p253
      // Predicated region
      $region9: #{forward.1} parent=5 // pred_check
        _
      $region10: #{forward.1} parent=5 // pred_check_branch
        %256 = sbr.rel (%p253) target = $region12
      $region11: #{forward.1} parent=5 // pred_region
        %s257 = ssub.s32 %s23, 1
        // Predicated region
        $region13: #{forward.1} parent=11 // pred_check
          %p258 = pneg %p70
        $region14: #{forward.1} parent=11 // pred_check_branch
          %260 = sbr.rel (%p258) target = $region16
        $region15: #{forward.1} parent=11 // pred_region
          %262 = vsyncadd [#allocation3], 0
          %s263 = sshll.u32 %s1, 4
          %s264 = int_to_ptr.hbm [resolvable:$true] %s263
          %s265 = sshll.u32 [#allocation2], 4
          %s266 = int_to_ptr.vmem [resolvable:$true] %s265
          %271 = dma.hbm_to_vmem [thread:$0]  %s264, 2304, %s266, [#allocation3], 64, 64, 4
        $region16: #{forward.1} parent=11 // pred_fallthru
          _
        // Predicated region
        $region17: #{forward.1} parent=11 // pred_check
          %p272 = pneg %p91
        $region18: #{forward.1} parent=11 // pred_check_branch
          %274 = sbr.rel (%p272) target = $region20
        $region19: #{forward.1} parent=11 // pred_region
          %276 = vsyncadd [#allocation6], 0
          %s278 = sshll.u32 %s2, 4
          %s279 = int_to_ptr.hbm [resolvable:$true] %s278
          %s280 = sshll.u32 [#allocation5], 4
          %s281 = int_to_ptr.vmem [resolvable:$true] %s280
          %283 = dma.hbm_to_vmem [thread:$0]  %s279, 16, %s281, [#allocation6]
        $region20: #{forward.1} parent=11 // pred_fallthru
          _
        // Predicated region
        $region21: #{forward.1} parent=11 // pred_check
          %p284 = pneg %p112
        $region22: #{forward.1} parent=11 // pred_check_branch
          %286 = sbr.rel (%p284) target = $region24
        $region23: #{forward.1} parent=11 // pred_region
          %288 = vsyncadd [#allocation6], 0
          %s289 = sshll.u32 %s3, 4
          %s290 = int_to_ptr.hbm [resolvable:$true] %s289
          %s291 = sshll.u32 [#allocation7], 4
          %s292 = int_to_ptr.vmem [resolvable:$true] %s291
          %297 = dma.hbm_to_vmem [thread:$0]  %s290, 5376, %s292, [#allocation6], 128, 128, 8
        $region24: #{forward.1} parent=11 // pred_fallthru
          _
        // Predicated region
        $region25: #{forward.1} parent=11 // pred_check
          %p298 = pneg %p133
        $region26: #{forward.1} parent=11 // pred_check_branch
          %300 = sbr.rel (%p298) target = $region28
        $region27: #{forward.1} parent=11 // pred_region
          %302 = vsyncadd [#allocation9], 0
          %s304 = sshll.u32 %s4, 4
          %s305 = int_to_ptr.hbm [resolvable:$true] %s304
          %s306 = sshll.u32 [#allocation8], 4
          %s307 = int_to_ptr.vmem [resolvable:$true] %s306
          %309 = dma.hbm_to_vmem [thread:$0]  %s305, 32, %s307, [#allocation9]
        $region28: #{forward.1} parent=11 // pred_fallthru
          _
        // Predicated region
        $region29: #{forward.1} parent=11 // pred_check
          %p310 = pneg %p154
        $region30: #{forward.1} parent=11 // pred_check_branch
          %312 = sbr.rel (%p310) target = $region32
        $region31: #{forward.1} parent=11 // pred_region
          %314 = vsyncadd [#allocation9], 0
          %s315 = sshll.u32 %s5, 4
          %s316 = int_to_ptr.hbm [resolvable:$true] %s315
          %s317 = sshll.u32 [#allocation10], 4
          %s318 = int_to_ptr.vmem [resolvable:$true] %s317
          %323 = dma.hbm_to_vmem [thread:$0]  %s316, 7680, %s318, [#allocation9], 128, 128, 8
        $region32: #{forward.1} parent=11 // pred_fallthru
          _
        // Predicated region
        $region33: #{forward.1} parent=11 // pred_check
          %p324 = pneg %p175
        $region34: #{forward.1} parent=11 // pred_check_branch
          %326 = sbr.rel (%p324) target = $region36
        $region35: #{forward.1} parent=11 // pred_region
          %328 = vsyncadd [#allocation12], 0
          %s330 = sshll.u32 %s6, 4
          %s331 = int_to_ptr.hbm [resolvable:$true] %s330
          %s332 = sshll.u32 [#allocation11], 4
          %s333 = int_to_ptr.vmem [resolvable:$true] %s332
          %335 = dma.hbm_to_vmem [thread:$0]  %s331, 32, %s333, [#allocation12]
        $region36: #{forward.1} parent=11 // pred_fallthru
          _
        // Predicated region
        $region37: #{forward.1} parent=11 // pred_check
          %p336 = pneg %p196
        $region38: #{forward.1} parent=11 // pred_check_branch
          %338 = sbr.rel (%p336) target = $region40
        $region39: #{forward.1} parent=11 // pred_region
          %340 = vsyncadd [#allocation12], 0
          %s341 = sshll.u32 %s7, 4
          %s342 = int_to_ptr.hbm [resolvable:$true] %s341
          %s343 = sshll.u32 [#allocation13], 4
          %s344 = int_to_ptr.vmem [resolvable:$true] %s343
          %349 = dma.hbm_to_vmem [thread:$0]  %s342, 35328, %s344, [#allocation12], 128, 128, 8
        $region40: #{forward.1} parent=11 // pred_fallthru
          _
        // Predicated region
        $region41: #{forward.1} parent=11 // pred_check
          %p350 = pneg %p217
        $region42: #{forward.1} parent=11 // pred_check_branch
          %352 = sbr.rel (%p350) target = $region44
        $region43: #{forward.1} parent=11 // pred_region
          %354 = vsyncadd [#allocation15], 0
          %s356 = sshll.u32 %s8, 4
          %s357 = int_to_ptr.hbm [resolvable:$true] %s356
          %s358 = sshll.u32 [#allocation14], 4
          %s359 = int_to_ptr.vmem [resolvable:$true] %s358
          %361 = dma.hbm_to_vmem [thread:$0]  %s357, 16, %s359, [#allocation15]
        $region44: #{forward.1} parent=11 // pred_fallthru
          _
      $region12: #{forward.1} parent=5 // pred_fallthru
        _
      %p362 = scmp.lt.s32.totalorder %s23, 2
      // Predicated region
      $region45: #{forward.1} parent=5 // pred_check
        %p363 = pneg %p362
      $region46: #{forward.1} parent=5 // pred_check_branch
        %365 = sbr.rel (%p363) target = $region48
      $region47: #{forward.1} parent=5 // pred_region
        // Predicated region
        $region49: #{forward.1} parent=47 // pred_check
          %p366 = pneg %p43
        $region50: #{forward.1} parent=47 // pred_check_branch
          %368 = sbr.rel (%p366) target = $region52
        $region51: #{forward.1} parent=47 // pred_region
          %p369 = scmp.lt.s32.totalorder %s23, 1
          %s370 = scalar_select %p369, %s23, 1
          %s371 = smul.addr %s370, 4
          %s372 = smul.addr %s371, 4
          %s373 = scalar_lea.vmem %s0, %s372
        $region52: #{forward.1} parent=47 // pred_fallthru
          _
      $region48: #{forward.1} parent=5 // pred_fallthru
        _
      %p374 = scmp.le.s32.totalorder 1, %s23
      %p375 = scmp.lt.s32.totalorder %s23, 3
      %p376 = pnand %p374, %p375
      %p377 = pneg %p376
      // Predicated region
      $region53: #{forward.1} parent=5 // pred_check
        _
      $region54: #{forward.1} parent=5 // pred_check_branch
        %379 = sbr.rel (%p376) target = $region56
      $region55: #{forward.1} parent=5 // pred_region
        %s380 = ssub.s32 %s23, 1
        // Predicated region
        $region57: #{forward.1} parent=55 // pred_check
          %p381 = pneg %p70
        $region58: #{forward.1} parent=55 // pred_check_branch
          %383 = sbr.rel (%p381) target = $region60
        $region59: #{forward.1} parent=55 // pred_region
          %385 = dma.done [#allocation3], 2304
        $region60: #{forward.1} parent=55 // pred_fallthru
          _
        // Predicated region
        $region61: #{forward.1} parent=55 // pred_check
          %p386 = pneg %p91
        $region62: #{forward.1} parent=55 // pred_check_branch
          %388 = sbr.rel (%p386) target = $region64
        $region63: #{forward.1} parent=55 // pred_region
          %390 = dma.done [#allocation6], 16
        $region64: #{forward.1} parent=55 // pred_fallthru
          _
        // Predicated region
        $region65: #{forward.1} parent=55 // pred_check
          %p391 = pneg %p112
        $region66: #{forward.1} parent=55 // pred_check_branch
          %393 = sbr.rel (%p391) target = $region68
        $region67: #{forward.1} parent=55 // pred_region
          %395 = dma.done [#allocation6], 5376
        $region68: #{forward.1} parent=55 // pred_fallthru
          _
        // Predicated region
        $region69: #{forward.1} parent=55 // pred_check
          %p396 = pneg %p133
        $region70: #{forward.1} parent=55 // pred_check_branch
          %398 = sbr.rel (%p396) target = $region72
        $region71: #{forward.1} parent=55 // pred_region
          %400 = dma.done [#allocation9], 32
        $region72: #{forward.1} parent=55 // pred_fallthru
          _
        // Predicated region
        $region73: #{forward.1} parent=55 // pred_check
          %p401 = pneg %p154
        $region74: #{forward.1} parent=55 // pred_check_branch
          %403 = sbr.rel (%p401) target = $region76
        $region75: #{forward.1} parent=55 // pred_region
          %405 = dma.done [#allocation9], 7680
        $region76: #{forward.1} parent=55 // pred_fallthru
          _
        // Predicated region
        $region77: #{forward.1} parent=55 // pred_check
          %p406 = pneg %p175
        $region78: #{forward.1} parent=55 // pred_check_branch
          %408 = sbr.rel (%p406) target = $region80
        $region79: #{forward.1} parent=55 // pred_region
          %410 = dma.done [#allocation12], 32
        $region80: #{forward.1} parent=55 // pred_fallthru
          _
        // Predicated region
        $region81: #{forward.1} parent=55 // pred_check
          %p411 = pneg %p196
        $region82: #{forward.1} parent=55 // pred_check_branch
          %413 = sbr.rel (%p411) target = $region84
        $region83: #{forward.1} parent=55 // pred_region
          %415 = dma.done [#allocation12], 35328
        $region84: #{forward.1} parent=55 // pred_fallthru
          _
        // Predicated region
        $region85: #{forward.1} parent=55 // pred_check
          %p416 = pneg %p217
        $region86: #{forward.1} parent=55 // pred_check_branch
          %418 = sbr.rel (%p416) target = $region88
        $region87: #{forward.1} parent=55 // pred_region
          %420 = dma.done [#allocation15], 16
        $region88: #{forward.1} parent=55 // pred_fallthru
          _
        %p421 = scmp.lt.s32.totalorder %s28, 1
        %s422 = scalar_select %p421, %s28, 1
        %s423 = smul.addr %s422, 4
        %s424 = smul.addr %s423, 4
        %s425 = scalar_lea.vmem %s0, %s424
        %p426 = pneg %p49
        %p427 = pneg %p46
        %p428 = pneg %p70
        %p429 = pneg %p67
        %p430 = pneg %p91
        %p431 = pneg %p88
        %p432 = pneg %p112
        %p433 = pneg %p109
        %p434 = pneg %p133
        %p435 = pneg %p130
        %p436 = pneg %p154
        %p437 = pneg %p151
        %p438 = pneg %p175
        %p439 = pneg %p172
        %p440 = pneg %p196
        %p441 = pneg %p193
        %p442 = pneg %p217
        %p443 = pneg %p214
        %p444 = pneg %p243
        %p445 = pneg %p240
        %s446 = sand.u32 %s230, 1
        %s447 = scalar_lea.sflag [#allocation4], %s446
        %s448 = sand.u32 %s230, 1
        %s449 = scalar_lea.vmem [#allocation16], %s448
        %p450 = scmp.lt.s32.totalorder %s28, 1
        %s451 = scalar_select %p450, %s28, 1
        %s452 = smul.addr %s451, 4
        %s453 = smul.addr %s452, 4
        %s454 = scalar_lea.vmem %s0, %s453
        %v456 = vld [vmem:[#allocation5] sm:$0x1]
        %v457 = vld [vmem:[#allocation8] sm:$0x3]
        %v458 = vld [vmem:[#allocation11] sm:$0x3]
        %v459 = vld [vmem:[#allocation14] sm:$0x1]
        %v460 = vld [vmem:[%s454] sm:$0xf]
        %v461 = vld [vmem:[%s454 + $0x4] sm:$0xf]
        %v462 = vld [vmem:[%s454 + $0x8] sm:$0xf]
        %v463 = vld [vmem:[%s454 + $0xc] sm:$0x7]
        %v464 = vld [vmem:[#allocation2] sm:$0xf]
        %v465 = vld [vmem:[#allocation2 + $0x4] sm:$0xf]
        %v466 = vld [vmem:[#allocation2 + $0x8] sm:$0xf]
        %v467 = vld [vmem:[#allocation2 + $0xc] sm:$0xf]
        %v468 = vld [vmem:[#allocation2 + $0x10] sm:$0xf]
        %v469 = vld [vmem:[#allocation2 + $0x14] sm:$0xf]
        %v470 = vld [vmem:[#allocation2 + $0x18] sm:$0xf]
        %v471 = vld [vmem:[#allocation2 + $0x1c] sm:$0xf]
        %v472 = vld [vmem:[#allocation2 + $0x20] sm:$0xf]
        %v473 = vld [vmem:[#allocation2 + $0x24] sm:$0xf]
        %v474 = vld [vmem:[#allocation2 + $0x28] sm:$0xf]
        %v475 = vld [vmem:[#allocation2 + $0x2c] sm:$0x1]
        %s476 = scalar_lea.vmem [#allocation2], 48
        %v477 = vld [vmem:[%s476] sm:$0xf]
        %v478 = vld [vmem:[%s476 + $0x4] sm:$0xf]
        %v479 = vld [vmem:[%s476 + $0x8] sm:$0xf]
        %v480 = vld [vmem:[%s476 + $0xc] sm:$0xf]
        %v481 = vld [vmem:[%s476 + $0x10] sm:$0xf]
        %v482 = vld [vmem:[%s476 + $0x14] sm:$0xf]
        %v483 = vld [vmem:[%s476 + $0x18] sm:$0xf]
        %v484 = vld [vmem:[%s476 + $0x1c] sm:$0xf]
        %v485 = vld [vmem:[%s476 + $0x20] sm:$0xf]
        %v486 = vld [vmem:[%s476 + $0x24] sm:$0xf]
        %v487 = vld [vmem:[%s476 + $0x28] sm:$0xf]
        %v488 = vld [vmem:[%s476 + $0x2c] sm:$0x1]
        %v493 = vunpack.c.l.b16 %v460
        %v494 = vunpack.c.l.b16 %v461
        %v495 = vunpack.c.l.b16 %v462
        %v496 = vunpack.c.l.b16 %v463
        %v497 = vpack.c.b16 %v494, %v493
        %v498 = vpack.c.b16 %v496, %v495
        %vm499 = vsmask.f32 7424
        %v501 = vshrl.u32 %v497, 16
        %v503 = vshll.u32 %v497, 16
        %v505 = vrot.slane %v503, 1
        %v506 = vor.u32 %v501, %v505
        %v508 = vshll.u32 %v498, 16
        %v510 = vrot.slane %v508, 1
        %v511 = vsel %vm499, %v506, %v510
        %v512 = vshrl.u32 %v498, 16
        %v514 = vor.u32 %v512, %v510
        %v527 = vunpack.c.l.b16 %v477
        %v528 = vunpack.c.l.b16 %v478
        %v529 = vunpack.c.l.b16 %v479
        %v530 = vunpack.c.l.b16 %v480
        %v531 = vunpack.c.l.b16 %v481
        %v532 = vunpack.c.l.b16 %v482
        %v533 = vunpack.c.l.b16 %v483
        %v534 = vunpack.c.l.b16 %v484
        %v535 = vunpack.c.l.b16 %v485
        %v536 = vunpack.c.l.b16 %v486
        %v537 = vunpack.c.l.b16 %v487
        %v538 = vunpack.c.l.b16 %v488
        %v539 = vpack.c.b16 %v528, %v527
        %v540 = vpack.c.b16 %v530, %v529
        %v541 = vpack.c.b16 %v532, %v531
        %v542 = vpack.c.b16 %v534, %v533
        %v543 = vpack.c.b16 %v536, %v535
        %v544 = vpack.c.b16 %v538, %v537
        %vm550 = vcmask 736256
        %v552 = vsel %vm550, %v511, 0
        %v555 = vsel %vm550, %v514, 0
        %vm557 = vcmask 1044480
        %v559 = vsel %vm557, %v544, 0
        %561 = vmatpush.bf16.msra.mxu0 0
        %562 = vmatpush.bf16.msra.mxu0 0
        %563 = vmatpush.bf16.msra.mxu0 %v559
        %564 = vmatpush.bf16.msra.mxu0 %v543
        %565 = vmatpush.bf16.msra.mxu0 %v542
        %566 = vmatpush.bf16.msra.mxu0 %v541
        %567 = vmatpush.bf16.msra.mxu0 %v540
        %568 = vmatpush.bf16.msra.mxu0 %v539
        %569 = vmatmul.bf16.gmra.mxu0 %v552
        %v570 = vpop.f32.mrf.mxu0
        %v571 = vadd.f32 0.0, %v570
        %v572 = vpop.f32.mrf.mxu0
        %v573 = vadd.f32 0.0, %v572
        %574 = vmatmul.bf16.gmra.mxu0 %v555
        %v575 = vpop.f32.mrf.mxu0
        %v576 = vadd.f32 0.0, %v575
        %v577 = vpop.f32.mrf.mxu0
        %v578 = vadd.f32 0.0, %v577
        %579 = vdwg.mxu0
        %v592 = vunpack.c.l.b16 %v464
        %v593 = vunpack.c.l.b16 %v465
        %v594 = vunpack.c.l.b16 %v466
        %v595 = vunpack.c.l.b16 %v467
        %v596 = vunpack.c.l.b16 %v468
        %v597 = vunpack.c.l.b16 %v469
        %v598 = vunpack.c.l.b16 %v470
        %v599 = vunpack.c.l.b16 %v471
        %v600 = vunpack.c.l.b16 %v472
        %v601 = vunpack.c.l.b16 %v473
        %v602 = vunpack.c.l.b16 %v474
        %v603 = vunpack.c.l.b16 %v475
        %v604 = vpack.c.b16 %v593, %v592
        %v605 = vpack.c.b16 %v595, %v594
        %v606 = vpack.c.b16 %v597, %v596
        %v607 = vpack.c.b16 %v599, %v598
        %v608 = vpack.c.b16 %v601, %v600
        %v609 = vpack.c.b16 %v603, %v602
        %v615 = vsel %vm550, %v497, 0
        %v617 = vsel %vm550, %v498, 0
        %v620 = vsel %vm557, %v609, 0
        %622 = vmatpush.bf16.msra.mxu0 0
        %623 = vmatpush.bf16.msra.mxu0 0
        %624 = vmatpush.bf16.msra.mxu0 %v620
        %625 = vmatpush.bf16.msra.mxu0 %v608
        %626 = vmatpush.bf16.msra.mxu0 %v607
        %627 = vmatpush.bf16.msra.mxu0 %v606
        %628 = vmatpush.bf16.msra.mxu0 %v605
        %629 = vmatpush.bf16.msra.mxu0 %v604
        %630 = vmatmul.bf16.gmra.mxu0 %v615
        %v631 = vpop.f32.mrf.mxu0
        %v632 = vadd.f32 %v571, %v631
        %v633 = vpop.f32.mrf.mxu0
        %v634 = vadd.f32 %v573, %v633
        %635 = vmatmul.bf16.gmra.mxu0 %v617
        %v636 = vpop.f32.mrf.mxu0
        %v637 = vadd.f32 %v576, %v636
        %v638 = vpop.f32.mrf.mxu0
        %v639 = vadd.f32 %v578, %v638
        %640 = vdwg.mxu0
        %s641 = scalar_lea.vmem [#allocation2], 96
        %v642 = vld [vmem:[%s641] sm:$0xf]
        %v643 = vld [vmem:[%s641 + $0x4] sm:$0xf]
        %v644 = vld [vmem:[%s641 + $0x8] sm:$0xf]
        %v645 = vld [vmem:[%s641 + $0xc] sm:$0xf]
        %v646 = vld [vmem:[%s641 + $0x10] sm:$0xf]
        %v647 = vld [vmem:[%s641 + $0x14] sm:$0xf]
        %v648 = vld [vmem:[%s641 + $0x18] sm:$0xf]
        %v649 = vld [vmem:[%s641 + $0x1c] sm:$0xf]
        %v650 = vld [vmem:[%s641 + $0x20] sm:$0xf]
        %v651 = vld [vmem:[%s641 + $0x24] sm:$0xf]
        %v652 = vld [vmem:[%s641 + $0x28] sm:$0xf]
        %v653 = vld [vmem:[%s641 + $0x2c] sm:$0x1]
        %vm654 = vcmask 1046528
        %v655 = vrot.slane %v497, 1
        %v656 = vrot.slane %v498, 1
        %v657 = vsel %vm654, %v655, %v656
        %v670 = vunpack.c.l.b16 %v642
        %v671 = vunpack.c.l.b16 %v643
        %v672 = vunpack.c.l.b16 %v644
        %v673 = vunpack.c.l.b16 %v645
        %v674 = vunpack.c.l.b16 %v646
        %v675 = vunpack.c.l.b16 %v647
        %v676 = vunpack.c.l.b16 %v648
        %v677 = vunpack.c.l.b16 %v649
        %v678 = vunpack.c.l.b16 %v650
        %v679 = vunpack.c.l.b16 %v651
        %v680 = vunpack.c.l.b16 %v652
        %v681 = vunpack.c.l.b16 %v653
        %v682 = vpack.c.b16 %v671, %v670
        %v683 = vpack.c.b16 %v673, %v672
        %v684 = vpack.c.b16 %v675, %v674
        %v685 = vpack.c.b16 %v677, %v676
        %v686 = vpack.c.b16 %v679, %v678
        %v687 = vpack.c.b16 %v681, %v680
        %v694 = vsel %vm550, %v657, 0
        %v697 = vsel %vm550, %v656, 0
        %v700 = vsel %vm557, %v687, 0
        %702 = vmatpush.bf16.msra.mxu0 0
        %703 = vmatpush.bf16.msra.mxu0 0
        %704 = vmatpush.bf16.msra.mxu0 %v700
        %705 = vmatpush.bf16.msra.mxu0 %v686
        %706 = vmatpush.bf16.msra.mxu0 %v685
        %707 = vmatpush.bf16.msra.mxu0 %v684
        %708 = vmatpush.bf16.msra.mxu0 %v683
        %709 = vmatpush.bf16.msra.mxu0 %v682
        %710 = vmatmul.bf16.gmra.mxu0 %v694
        %v711 = vpop.f32.mrf.mxu0
        %v712 = vadd.f32 0.0, %v711
        %v713 = vpop.f32.mrf.mxu0
        %v714 = vadd.f32 0.0, %v713
        %715 = vmatmul.bf16.gmra.mxu0 %v697
        %v716 = vpop.f32.mrf.mxu0
        %v717 = vadd.f32 0.0, %v716
        %v718 = vpop.f32.mrf.mxu0
        %v719 = vadd.f32 0.0, %v718
        %720 = vdwg.mxu0
        %v721 = vadd.f32 %v632, %v712
        %v722 = vadd.f32 %v634, %v714
        %v723 = vadd.f32 %v637, %v717
        %v724 = vadd.f32 %v639, %v719
        %v726 = vperm.slane %v456, 0
        %v728 = vadd.f32 %v721, %v726
        %v729 = vadd.f32 %v722, %v726
        %v730 = vadd.f32 %v723, %v726
        %v731 = vadd.f32 %v724, %v726
        %v732 = vmax.f32 %v728, 0.0
        %v733 = vmax.f32 %v729, 0.0
        %v734 = vmax.f32 %v730, 0.0
        %v735 = vmax.f32 %v731, 0.0
        %v736 = vpack.c.bf16 %v732, %v732
        %v737 = vpack.c.bf16 %v733, %v733
        %v738 = vpack.c.bf16 %v734, %v734
        %v739 = vpack.c.bf16 %v735, %v735
        %v740 = vld [vmem:[#allocation7] sm:$0xff]
        %v741 = vld [vmem:[#allocation7 + $0x8] sm:$0xff]
        %v742 = vld [vmem:[#allocation7 + $0x10] sm:$0xff]
        %v743 = vld [vmem:[#allocation7 + $0x18] sm:$0xff]
        %v744 = vld [vmem:[#allocation7 + $0x20] sm:$0xff]
        %v745 = vld [vmem:[#allocation7 + $0x28] sm:$0xff]
        %v746 = vld [vmem:[#allocation7 + $0x30] sm:$0xff]
        %v747 = vld [vmem:[#allocation7 + $0x38] sm:$0xff]
        %v748 = vld [vmem:[#allocation7 + $0x40] sm:$0xff]
        %v749 = vld [vmem:[#allocation7 + $0x48] sm:$0xff]
        %v750 = vld [vmem:[#allocation7 + $0x50] sm:$0xff]
        %v751 = vld [vmem:[#allocation7 + $0x58] sm:$0xff]
        %v752 = vld [vmem:[#allocation7 + $0x60] sm:$0xff]
        %v753 = vld [vmem:[#allocation7 + $0x68] sm:$0xff]
        %s754 = scalar_lea.vmem [#allocation7], 112
        %v755 = vld [vmem:[%s754] sm:$0xff]
        %v756 = vld [vmem:[%s754 + $0x8] sm:$0xff]
        %v757 = vld [vmem:[%s754 + $0x10] sm:$0xff]
        %v758 = vld [vmem:[%s754 + $0x18] sm:$0xff]
        %v759 = vld [vmem:[%s754 + $0x20] sm:$0xff]
        %v760 = vld [vmem:[%s754 + $0x28] sm:$0xff]
        %v761 = vld [vmem:[%s754 + $0x30] sm:$0xff]
        %v762 = vld [vmem:[%s754 + $0x38] sm:$0xff]
        %v763 = vld [vmem:[%s754 + $0x40] sm:$0xff]
        %v764 = vld [vmem:[%s754 + $0x48] sm:$0xff]
        %v765 = vld [vmem:[%s754 + $0x50] sm:$0xff]
        %v766 = vld [vmem:[%s754 + $0x58] sm:$0xff]
        %v767 = vld [vmem:[%s754 + $0x60] sm:$0xff]
        %v768 = vld [vmem:[%s754 + $0x68] sm:$0xff]
        %v773 = vunpack.c.l.b16 %v736
        %v774 = vunpack.c.l.b16 %v737
        %v775 = vunpack.c.l.b16 %v738
        %v776 = vunpack.c.l.b16 %v739
        %v777 = vpack.c.b16 %v774, %v773
        %v778 = vpack.c.b16 %v776, %v775
        %v780 = vshrl.u32 %v777, 16
        %v782 = vshll.u32 %v777, 16
        %v784 = vrot.slane %v782, 1
        %v785 = vor.u32 %v780, %v784
        %v787 = vshll.u32 %v778, 16
        %v789 = vrot.slane %v787, 1
        %v790 = vsel %vm499, %v785, %v789
        %v791 = vshrl.u32 %v778, 16
        %v793 = vor.u32 %v791, %v789
        %v808 = vunpack.c.l.b16 %v755
        %v809 = vunpack.c.h.b16 %v755
        %v810 = vunpack.c.l.b16 %v756
        %v811 = vunpack.c.h.b16 %v756
        %v812 = vunpack.c.l.b16 %v757
        %v813 = vunpack.c.h.b16 %v757
        %v814 = vunpack.c.l.b16 %v758
        %v815 = vunpack.c.h.b16 %v758
        %v816 = vunpack.c.l.b16 %v759
        %v817 = vunpack.c.h.b16 %v759
        %v818 = vunpack.c.l.b16 %v760
        %v819 = vunpack.c.h.b16 %v760
        %v820 = vunpack.c.l.b16 %v761
        %v821 = vunpack.c.h.b16 %v761
        %v822 = vunpack.c.l.b16 %v762
        %v823 = vunpack.c.h.b16 %v762
        %v824 = vunpack.c.l.b16 %v763
        %v825 = vunpack.c.h.b16 %v763
        %v826 = vunpack.c.l.b16 %v764
        %v827 = vunpack.c.h.b16 %v764
        %v828 = vunpack.c.l.b16 %v765
        %v829 = vunpack.c.h.b16 %v765
        %v830 = vunpack.c.l.b16 %v766
        %v831 = vunpack.c.h.b16 %v766
        %v832 = vunpack.c.l.b16 %v767
        %v833 = vunpack.c.h.b16 %v767
        %v834 = vunpack.c.l.b16 %v768
        %v835 = vunpack.c.h.b16 %v768
        %v836 = vpack.c.b16 %v810, %v808
        %v837 = vpack.c.b16 %v811, %v809
        %v838 = vpack.c.b16 %v814, %v812
        %v839 = vpack.c.b16 %v815, %v813
        %v840 = vpack.c.b16 %v818, %v816
        %v841 = vpack.c.b16 %v819, %v817
        %v842 = vpack.c.b16 %v822, %v820
        %v843 = vpack.c.b16 %v823, %v821
        %v844 = vpack.c.b16 %v826, %v824
        %v845 = vpack.c.b16 %v827, %v825
        %v846 = vpack.c.b16 %v830, %v828
        %v847 = vpack.c.b16 %v831, %v829
        %v848 = vpack.c.b16 %v834, %v832
        %v849 = vpack.c.b16 %v835, %v833
        %vm864 = vcmask 916480
        %v866 = vsel %vm864, %v790, 0
        %v869 = vsel %vm864, %v793, 0
        %871 = vmatpush.bf16.msra.mxu0 0
        %872 = vmatpush.bf16.msra.mxu0 %v848
        %873 = vmatpush.bf16.msra.mxu0 %v846
        %874 = vmatpush.bf16.msra.mxu0 %v844
        %875 = vmatpush.bf16.msra.mxu0 %v842
        %876 = vmatpush.bf16.msra.mxu0 %v840
        %877 = vmatpush.bf16.msra.mxu0 %v838
        %878 = vmatpush.bf16.msra.mxu0 %v836
        %879 = vmatmul.bf16.gmra.mxu0 %v866
        %v880 = vpop.f32.mrf.mxu0
        %v881 = vadd.f32 0.0, %v880
        %v882 = vpop.f32.mrf.mxu0
        %v883 = vadd.f32 0.0, %v882
        %884 = vmatmul.bf16.gmra.mxu0 %v869
        %v885 = vpop.f32.mrf.mxu0
        %v886 = vadd.f32 0.0, %v885
        %v887 = vpop.f32.mrf.mxu0
        %v888 = vadd.f32 0.0, %v887
        %889 = vdwg.mxu0
        %890 = vmatpush.bf16.msra.mxu0 0
        %891 = vmatpush.bf16.msra.mxu0 %v849
        %892 = vmatpush.bf16.msra.mxu0 %v847
        %893 = vmatpush.bf16.msra.mxu0 %v845
        %894 = vmatpush.bf16.msra.mxu0 %v843
        %895 = vmatpush.bf16.msra.mxu0 %v841
        %896 = vmatpush.bf16.msra.mxu0 %v839
        %897 = vmatpush.bf16.msra.mxu0 %v837
        %898 = vmatmul.bf16.gmra.mxu0 %v866
        %v899 = vpop.f32.mrf.mxu0
        %v900 = vadd.f32 0.0, %v899
        %v901 = vpop.f32.mrf.mxu0
        %v902 = vadd.f32 0.0, %v901
        %903 = vmatmul.bf16.gmra.mxu0 %v869
        %v904 = vpop.f32.mrf.mxu0
        %v905 = vadd.f32 0.0, %v904
        %v906 = vpop.f32.mrf.mxu0
        %v907 = vadd.f32 0.0, %v906
        %908 = vdwg.mxu0
        %v923 = vunpack.c.l.b16 %v740
        %v924 = vunpack.c.h.b16 %v740
        %v925 = vunpack.c.l.b16 %v741
        %v926 = vunpack.c.h.b16 %v741
        %v927 = vunpack.c.l.b16 %v742
        %v928 = vunpack.c.h.b16 %v742
        %v929 = vunpack.c.l.b16 %v743
        %v930 = vunpack.c.h.b16 %v743
        %v931 = vunpack.c.l.b16 %v744
        %v932 = vunpack.c.h.b16 %v744
        %v933 = vunpack.c.l.b16 %v745
        %v934 = vunpack.c.h.b16 %v745
        %v935 = vunpack.c.l.b16 %v746
        %v936 = vunpack.c.h.b16 %v746
        %v937 = vunpack.c.l.b16 %v747
        %v938 = vunpack.c.h.b16 %v747
        %v939 = vunpack.c.l.b16 %v748
        %v940 = vunpack.c.h.b16 %v748
        %v941 = vunpack.c.l.b16 %v749
        %v942 = vunpack.c.h.b16 %v749
        %v943 = vunpack.c.l.b16 %v750
        %v944 = vunpack.c.h.b16 %v750
        %v945 = vunpack.c.l.b16 %v751
        %v946 = vunpack.c.h.b16 %v751
        %v947 = vunpack.c.l.b16 %v752
        %v948 = vunpack.c.h.b16 %v752
        %v949 = vunpack.c.l.b16 %v753
        %v950 = vunpack.c.h.b16 %v753
        %v951 = vpack.c.b16 %v925, %v923
        %v952 = vpack.c.b16 %v926, %v924
        %v953 = vpack.c.b16 %v929, %v927
        %v954 = vpack.c.b16 %v930, %v928
        %v955 = vpack.c.b16 %v933, %v931
        %v956 = vpack.c.b16 %v934, %v932
        %v957 = vpack.c.b16 %v937, %v935
        %v958 = vpack.c.b16 %v938, %v936
        %v959 = vpack.c.b16 %v941, %v939
        %v960 = vpack.c.b16 %v942, %v940
        %v961 = vpack.c.b16 %v945, %v943
        %v962 = vpack.c.b16 %v946, %v944
        %v963 = vpack.c.b16 %v949, %v947
        %v964 = vpack.c.b16 %v950, %v948
        %v979 = vsel %vm864, %v777, 0
        %v981 = vsel %vm864, %v778, 0
        %983 = vmatpush.bf16.msra.mxu0 0
        %984 = vmatpush.bf16.msra.mxu0 %v963
        %985 = vmatpush.bf16.msra.mxu0 %v961
        %986 = vmatpush.bf16.msra.mxu0 %v959
        %987 = vmatpush.bf16.msra.mxu0 %v957
        %988 = vmatpush.bf16.msra.mxu0 %v955
        %989 = vmatpush.bf16.msra.mxu0 %v953
        %990 = vmatpush.bf16.msra.mxu0 %v951
        %991 = vmatmul.bf16.gmra.mxu0 %v979
        %v992 = vpop.f32.mrf.mxu0
        %v993 = vadd.f32 %v881, %v992
        %v994 = vpop.f32.mrf.mxu0
        %v995 = vadd.f32 %v883, %v994
        %996 = vmatmul.bf16.gmra.mxu0 %v981
        %v997 = vpop.f32.mrf.mxu0
        %v998 = vadd.f32 %v886, %v997
        %v999 = vpop.f32.mrf.mxu0
        %v1000 = vadd.f32 %v888, %v999
        %1001 = vdwg.mxu0
        %1002 = vmatpush.bf16.msra.mxu0 0
        %1003 = vmatpush.bf16.msra.mxu0 %v964
        %1004 = vmatpush.bf16.msra.mxu0 %v962
        %1005 = vmatpush.bf16.msra.mxu0 %v960
        %1006 = vmatpush.bf16.msra.mxu0 %v958
        %1007 = vmatpush.bf16.msra.mxu0 %v956
        %1008 = vmatpush.bf16.msra.mxu0 %v954
        %1009 = vmatpush.bf16.msra.mxu0 %v952
        %1010 = vmatmul.bf16.gmra.mxu0 %v979
        %v1011 = vpop.f32.mrf.mxu0
        %v1012 = vadd.f32 %v900, %v1011
        %v1013 = vpop.f32.mrf.mxu0
        %v1014 = vadd.f32 %v902, %v1013
        %1015 = vmatmul.bf16.gmra.mxu0 %v981
        %v1016 = vpop.f32.mrf.mxu0
        %v1017 = vadd.f32 %v905, %v1016
        %v1018 = vpop.f32.mrf.mxu0
        %v1019 = vadd.f32 %v907, %v1018
        %1020 = vdwg.mxu0
        %s1021 = scalar_lea.vmem [#allocation7], 224
        %v1022 = vld [vmem:[%s1021] sm:$0xff]
        %v1023 = vld [vmem:[%s1021 + $0x8] sm:$0xff]
        %v1024 = vld [vmem:[%s1021 + $0x10] sm:$0xff]
        %v1025 = vld [vmem:[%s1021 + $0x18] sm:$0xff]
        %v1026 = vld [vmem:[%s1021 + $0x20] sm:$0xff]
        %v1027 = vld [vmem:[%s1021 + $0x28] sm:$0xff]
        %v1028 = vld [vmem:[%s1021 + $0x30] sm:$0xff]
        %v1029 = vld [vmem:[%s1021 + $0x38] sm:$0xff]
        %v1030 = vld [vmem:[%s1021 + $0x40] sm:$0xff]
        %v1031 = vld [vmem:[%s1021 + $0x48] sm:$0xff]
        %v1032 = vld [vmem:[%s1021 + $0x50] sm:$0xff]
        %v1033 = vld [vmem:[%s1021 + $0x58] sm:$0xff]
        %v1034 = vld [vmem:[%s1021 + $0x60] sm:$0xff]
        %v1035 = vld [vmem:[%s1021 + $0x68] sm:$0xff]
        %v1036 = vrot.slane %v777, 1
        %v1037 = vrot.slane %v778, 1
        %v1038 = vsel %vm654, %v1036, %v1037
        %v1053 = vunpack.c.l.b16 %v1022
        %v1054 = vunpack.c.h.b16 %v1022
        %v1055 = vunpack.c.l.b16 %v1023
        %v1056 = vunpack.c.h.b16 %v1023
        %v1057 = vunpack.c.l.b16 %v1024
        %v1058 = vunpack.c.h.b16 %v1024
        %v1059 = vunpack.c.l.b16 %v1025
        %v1060 = vunpack.c.h.b16 %v1025
        %v1061 = vunpack.c.l.b16 %v1026
        %v1062 = vunpack.c.h.b16 %v1026
        %v1063 = vunpack.c.l.b16 %v1027
        %v1064 = vunpack.c.h.b16 %v1027
        %v1065 = vunpack.c.l.b16 %v1028
        %v1066 = vunpack.c.h.b16 %v1028
        %v1067 = vunpack.c.l.b16 %v1029
        %v1068 = vunpack.c.h.b16 %v1029
        %v1069 = vunpack.c.l.b16 %v1030
        %v1070 = vunpack.c.h.b16 %v1030
        %v1071 = vunpack.c.l.b16 %v1031
        %v1072 = vunpack.c.h.b16 %v1031
        %v1073 = vunpack.c.l.b16 %v1032
        %v1074 = vunpack.c.h.b16 %v1032
        %v1075 = vunpack.c.l.b16 %v1033
        %v1076 = vunpack.c.h.b16 %v1033
        %v1077 = vunpack.c.l.b16 %v1034
        %v1078 = vunpack.c.h.b16 %v1034
        %v1079 = vunpack.c.l.b16 %v1035
        %v1080 = vunpack.c.h.b16 %v1035
        %v1081 = vpack.c.b16 %v1055, %v1053
        %v1082 = vpack.c.b16 %v1056, %v1054
        %v1083 = vpack.c.b16 %v1059, %v1057
        %v1084 = vpack.c.b16 %v1060, %v1058
        %v1085 = vpack.c.b16 %v1063, %v1061
        %v1086 = vpack.c.b16 %v1064, %v1062
        %v1087 = vpack.c.b16 %v1067, %v1065
        %v1088 = vpack.c.b16 %v1068, %v1066
        %v1089 = vpack.c.b16 %v1071, %v1069
        %v1090 = vpack.c.b16 %v1072, %v1070
        %v1091 = vpack.c.b16 %v1075, %v1073
        %v1092 = vpack.c.b16 %v1076, %v1074
        %v1093 = vpack.c.b16 %v1079, %v1077
        %v1094 = vpack.c.b16 %v1080, %v1078
        %v1110 = vsel %vm864, %v1038, 0
        %v1113 = vsel %vm864, %v1037, 0
        %1115 = vmatpush.bf16.msra.mxu0 0
        %1116 = vmatpush.bf16.msra.mxu0 %v1093
        %1117 = vmatpush.bf16.msra.mxu0 %v1091
        %1118 = vmatpush.bf16.msra.mxu0 %v1089
        %1119 = vmatpush.bf16.msra.mxu0 %v1087
        %1120 = vmatpush.bf16.msra.mxu0 %v1085
        %1121 = vmatpush.bf16.msra.mxu0 %v1083
        %1122 = vmatpush.bf16.msra.mxu0 %v1081
        %1123 = vmatmul.bf16.gmra.mxu0 %v1110
        %v1124 = vpop.f32.mrf.mxu0
        %v1125 = vadd.f32 0.0, %v1124
        %v1126 = vpop.f32.mrf.mxu0
        %v1127 = vadd.f32 0.0, %v1126
        %1128 = vmatmul.bf16.gmra.mxu0 %v1113
        %v1129 = vpop.f32.mrf.mxu0
        %v1130 = vadd.f32 0.0, %v1129
        %v1131 = vpop.f32.mrf.mxu0
        %v1132 = vadd.f32 0.0, %v1131
        %1133 = vdwg.mxu0
        %1134 = vmatpush.bf16.msra.mxu0 0
        %1135 = vmatpush.bf16.msra.mxu0 %v1094
        %1136 = vmatpush.bf16.msra.mxu0 %v1092
        %1137 = vmatpush.bf16.msra.mxu0 %v1090
        %1138 = vmatpush.bf16.msra.mxu0 %v1088
        %1139 = vmatpush.bf16.msra.mxu0 %v1086
        %1140 = vmatpush.bf16.msra.mxu0 %v1084
        %1141 = vmatpush.bf16.msra.mxu0 %v1082
        %1142 = vmatmul.bf16.gmra.mxu0 %v1110
        %v1143 = vpop.f32.mrf.mxu0
        %v1144 = vadd.f32 0.0, %v1143
        %v1145 = vpop.f32.mrf.mxu0
        %v1146 = vadd.f32 0.0, %v1145
        %1147 = vmatmul.bf16.gmra.mxu0 %v1113
        %v1148 = vpop.f32.mrf.mxu0
        %v1149 = vadd.f32 0.0, %v1148
        %v1150 = vpop.f32.mrf.mxu0
        %v1151 = vadd.f32 0.0, %v1150
        %1152 = vdwg.mxu0
        %v1153 = vadd.f32 %v993, %v1125
        %v1154 = vadd.f32 %v1012, %v1144
        %v1155 = vadd.f32 %v995, %v1127
        %v1156 = vadd.f32 %v1014, %v1146
        %v1157 = vadd.f32 %v998, %v1130
        %v1158 = vadd.f32 %v1017, %v1149
        %v1159 = vadd.f32 %v1000, %v1132
        %v1160 = vadd.f32 %v1019, %v1151
        %v1162 = vperm.slane %v457, 0
        %v1163 = vperm.slane %v457, 1
        %v1166 = vadd.f32 %v1153, %v1162
        %v1167 = vadd.f32 %v1154, %v1163
        %v1168 = vadd.f32 %v1155, %v1162
        %v1169 = vadd.f32 %v1156, %v1163
        %v1170 = vadd.f32 %v1157, %v1162
        %v1171 = vadd.f32 %v1158, %v1163
        %v1172 = vadd.f32 %v1159, %v1162
        %v1173 = vadd.f32 %v1160, %v1163
        %v1174 = vmax.f32 %v1166, 0.0
        %v1175 = vmax.f32 %v1167, 0.0
        %v1176 = vmax.f32 %v1168, 0.0
        %v1177 = vmax.f32 %v1169, 0.0
        %v1178 = vmax.f32 %v1170, 0.0
        %v1179 = vmax.f32 %v1171, 0.0
        %v1180 = vmax.f32 %v1172, 0.0
        %v1181 = vmax.f32 %v1173, 0.0
        %v1182 = vpack.c.bf16 %v1175, %v1174
        %v1183 = vpack.c.bf16 %v1177, %v1176
        %v1184 = vpack.c.bf16 %v1179, %v1178
        %v1185 = vpack.c.bf16 %v1181, %v1180
        %v1186 = vld [vmem:[#allocation10] sm:$0xff]
        %v1187 = vld [vmem:[#allocation10 + $0x8] sm:$0xff]
        %v1188 = vld [vmem:[#allocation10 + $0x10] sm:$0xff]
        %v1189 = vld [vmem:[#allocation10 + $0x18] sm:$0xff]
        %v1190 = vld [vmem:[#allocation10 + $0x20] sm:$0xff]
        %v1191 = vld [vmem:[#allocation10 + $0x28] sm:$0xff]
        %v1192 = vld [vmem:[#allocation10 + $0x30] sm:$0xff]
        %v1193 = vld [vmem:[#allocation10 + $0x38] sm:$0xff]
        %v1194 = vld [vmem:[#allocation10 + $0x40] sm:$0xff]
        %v1195 = vld [vmem:[#allocation10 + $0x48] sm:$0xff]
        %v1196 = vld [vmem:[#allocation10 + $0x50] sm:$0xff]
        %v1197 = vld [vmem:[#allocation10 + $0x58] sm:$0xff]
        %v1198 = vld [vmem:[#allocation10 + $0x60] sm:$0xff]
        %v1199 = vld [vmem:[#allocation10 + $0x68] sm:$0xff]
        %v1200 = vld [vmem:[#allocation10 + $0x70] sm:$0xff]
        %v1201 = vld [vmem:[#allocation10 + $0x78] sm:$0xff]
        %v1202 = vld [vmem:[#allocation10 + $0x80] sm:$0xff]
        %v1203 = vld [vmem:[#allocation10 + $0x88] sm:$0xff]
        %v1204 = vld [vmem:[#allocation10 + $0x90] sm:$0xff]
        %v1205 = vld [vmem:[#allocation10 + $0x98] sm:$0x33]
        %s1206 = scalar_lea.vmem [#allocation10], 160
        %v1207 = vld [vmem:[%s1206] sm:$0xff]
        %v1208 = vld [vmem:[%s1206 + $0x8] sm:$0xff]
        %v1209 = vld [vmem:[%s1206 + $0x10] sm:$0xff]
        %v1210 = vld [vmem:[%s1206 + $0x18] sm:$0xff]
        %v1211 = vld [vmem:[%s1206 + $0x20] sm:$0xff]
        %v1212 = vld [vmem:[%s1206 + $0x28] sm:$0xff]
        %v1213 = vld [vmem:[%s1206 + $0x30] sm:$0xff]
        %v1214 = vld [vmem:[%s1206 + $0x38] sm:$0xff]
        %v1215 = vld [vmem:[%s1206 + $0x40] sm:$0xff]
        %v1216 = vld [vmem:[%s1206 + $0x48] sm:$0xff]
        %v1217 = vld [vmem:[%s1206 + $0x50] sm:$0xff]
        %v1218 = vld [vmem:[%s1206 + $0x58] sm:$0xff]
        %v1219 = vld [vmem:[%s1206 + $0x60] sm:$0xff]
        %v1220 = vld [vmem:[%s1206 + $0x68] sm:$0xff]
        %v1221 = vld [vmem:[%s1206 + $0x70] sm:$0xff]
        %v1222 = vld [vmem:[%s1206 + $0x78] sm:$0xff]
        %v1223 = vld [vmem:[%s1206 + $0x80] sm:$0xff]
        %v1224 = vld [vmem:[%s1206 + $0x88] sm:$0xff]
        %v1225 = vld [vmem:[%s1206 + $0x90] sm:$0xff]
        %v1226 = vld [vmem:[%s1206 + $0x98] sm:$0x33]
        %v1231 = vunpack.c.l.b16 %v1182
        %v1232 = vunpack.c.h.b16 %v1182
        %v1233 = vunpack.c.l.b16 %v1183
        %v1234 = vunpack.c.h.b16 %v1183
        %v1235 = vunpack.c.l.b16 %v1184
        %v1236 = vunpack.c.h.b16 %v1184
        %v1237 = vunpack.c.l.b16 %v1185
        %v1238 = vunpack.c.h.b16 %v1185
        %v1239 = vpack.c.b16 %v1233, %v1231
        %v1240 = vpack.c.b16 %v1234, %v1232
        %v1241 = vpack.c.b16 %v1237, %v1235
        %v1242 = vpack.c.b16 %v1238, %v1236
        %v1244 = vshrl.u32 %v1239, 16
        %v1246 = vshll.u32 %v1239, 16
        %v1248 = vrot.slane %v1246, 1
        %v1249 = vor.u32 %v1244, %v1248
        %v1251 = vshll.u32 %v1241, 16
        %v1253 = vrot.slane %v1251, 1
        %v1254 = vsel %vm499, %v1249, %v1253
        %v1256 = vshrl.u32 %v1240, 16
        %v1258 = vshll.u32 %v1240, 16
        %v1260 = vrot.slane %v1258, 1
        %v1261 = vor.u32 %v1256, %v1260
        %v1263 = vshll.u32 %v1242, 16
        %v1265 = vrot.slane %v1263, 1
        %v1266 = vsel %vm499, %v1261, %v1265
        %v1267 = vshrl.u32 %v1241, 16
        %v1269 = vor.u32 %v1267, %v1253
        %v1270 = vshrl.u32 %v1242, 16
        %v1272 = vor.u32 %v1270, %v1265
        %v1295 = vunpack.c.l.b16 %v1207
        %v1296 = vunpack.c.h.b16 %v1207
        %v1297 = vunpack.c.l.b16 %v1208
        %v1298 = vunpack.c.h.b16 %v1208
        %v1299 = vunpack.c.l.b16 %v1209
        %v1300 = vunpack.c.h.b16 %v1209
        %v1301 = vunpack.c.l.b16 %v1210
        %v1302 = vunpack.c.h.b16 %v1210
        %v1303 = vunpack.c.l.b16 %v1211
        %v1304 = vunpack.c.h.b16 %v1211
        %v1305 = vunpack.c.l.b16 %v1212
        %v1306 = vunpack.c.h.b16 %v1212
        %v1307 = vunpack.c.l.b16 %v1213
        %v1308 = vunpack.c.h.b16 %v1213
        %v1309 = vunpack.c.l.b16 %v1214
        %v1310 = vunpack.c.h.b16 %v1214
        %v1311 = vunpack.c.l.b16 %v1215
        %v1312 = vunpack.c.h.b16 %v1215
        %v1313 = vunpack.c.l.b16 %v1216
        %v1314 = vunpack.c.h.b16 %v1216
        %v1315 = vunpack.c.l.b16 %v1217
        %v1316 = vunpack.c.h.b16 %v1217
        %v1317 = vunpack.c.l.b16 %v1218
        %v1318 = vunpack.c.h.b16 %v1218
        %v1319 = vunpack.c.l.b16 %v1219
        %v1320 = vunpack.c.h.b16 %v1219
        %v1321 = vunpack.c.l.b16 %v1220
        %v1322 = vunpack.c.h.b16 %v1220
        %v1323 = vunpack.c.l.b16 %v1221
        %v1324 = vunpack.c.h.b16 %v1221
        %v1325 = vunpack.c.l.b16 %v1222
        %v1326 = vunpack.c.h.b16 %v1222
        %v1327 = vunpack.c.l.b16 %v1223
        %v1328 = vunpack.c.h.b16 %v1223
        %v1329 = vunpack.c.l.b16 %v1224
        %v1330 = vunpack.c.h.b16 %v1224
        %v1331 = vunpack.c.l.b16 %v1225
        %v1332 = vunpack.c.h.b16 %v1225
        %v1333 = vunpack.c.l.b16 %v1226
        %v1334 = vunpack.c.h.b16 %v1226
        %v1335 = vpack.c.b16 %v1297, %v1295
        %v1336 = vpack.c.b16 %v1298, %v1296
        %v1337 = vpack.c.b16 %v1301, %v1299
        %v1338 = vpack.c.b16 %v1302, %v1300
        %v1339 = vpack.c.b16 %v1305, %v1303
        %v1340 = vpack.c.b16 %v1306, %v1304
        %v1341 = vpack.c.b16 %v1309, %v1307
        %v1342 = vpack.c.b16 %v1310, %v1308
        %v1343 = vpack.c.b16 %v1313, %v1311
        %v1344 = vpack.c.b16 %v1314, %v1312
        %v1345 = vpack.c.b16 %v1317, %v1315
        %v1346 = vpack.c.b16 %v1318, %v1316
        %v1347 = vpack.c.b16 %v1321, %v1319
        %v1348 = vpack.c.b16 %v1322, %v1320
        %v1349 = vpack.c.b16 %v1325, %v1323
        %v1350 = vpack.c.b16 %v1326, %v1324
        %v1351 = vpack.c.b16 %v1329, %v1327
        %v1352 = vpack.c.b16 %v1330, %v1328
        %v1353 = vpack.c.b16 %v1333, %v1331
        %v1354 = vpack.c.b16 %v1334, %v1332
        %vm1373 = vcmask 228352
        %v1375 = vsel %vm1373, %v1266, 0
        %v1378 = vsel %vm1373, %v1272, 0
        %vm1380 = vcmask 1045504
        %v1382 = vsel %vm1380, %v1353, 0
        %v1385 = vsel %vm1380, %v1354, 0
        %1387 = vmatpush.bf16.msra.mxu0 %v1349
        %1388 = vmatpush.bf16.msra.mxu0 %v1347
        %1389 = vmatpush.bf16.msra.mxu0 %v1345
        %1390 = vmatpush.bf16.msra.mxu0 %v1343
        %1391 = vmatpush.bf16.msra.mxu0 %v1341
        %1392 = vmatpush.bf16.msra.mxu0 %v1339
        %1393 = vmatpush.bf16.msra.mxu0 %v1337
        %1394 = vmatpush.bf16.msra.mxu0 %v1335
        %1395 = vmatmul.bf16.gmra.mxu0 %v1254
        %v1396 = vpop.f32.mrf.mxu0
        %v1397 = vadd.f32 0.0, %v1396
        %v1398 = vpop.f32.mrf.mxu0
        %v1399 = vadd.f32 0.0, %v1398
        %1400 = vmatmul.bf16.gmra.mxu0 %v1269
        %v1401 = vpop.f32.mrf.mxu0
        %v1402 = vadd.f32 0.0, %v1401
        %v1403 = vpop.f32.mrf.mxu0
        %1404 = vdwg.mxu0
        %1405 = vmatpush.bf16.msra.mxu0 0
        %1406 = vmatpush.bf16.msra.mxu0 0
        %1407 = vmatpush.bf16.msra.mxu0 0
        %1408 = vmatpush.bf16.msra.mxu0 0
        %1409 = vmatpush.bf16.msra.mxu0 0
        %1410 = vmatpush.bf16.msra.mxu0 0
        %1411 = vmatpush.bf16.msra.mxu0 %v1382
        %1412 = vmatpush.bf16.msra.mxu0 %v1351
        %1413 = vmatmul.bf16.gmra.mxu0 %v1375
        %v1414 = vpop.f32.mrf.mxu0
        %v1415 = vadd.f32 %v1397, %v1414
        %v1416 = vpop.f32.mrf.mxu0
        %v1417 = vadd.f32 %v1399, %v1416
        %1418 = vmatmul.bf16.gmra.mxu0 %v1378
        %v1419 = vpop.f32.mrf.mxu0
        %v1420 = vadd.f32 %v1402, %v1419
        %v1421 = vpop.f32.mrf.mxu0
        %1422 = vdwg.mxu0
        %1423 = vmatpush.bf16.msra.mxu0 %v1350
        %1424 = vmatpush.bf16.msra.mxu0 %v1348
        %1425 = vmatpush.bf16.msra.mxu0 %v1346
        %1426 = vmatpush.bf16.msra.mxu0 %v1344
        %1427 = vmatpush.bf16.msra.mxu0 %v1342
        %1428 = vmatpush.bf16.msra.mxu0 %v1340
        %1429 = vmatpush.bf16.msra.mxu0 %v1338
        %1430 = vmatpush.bf16.msra.mxu0 %v1336
        %1431 = vmatmul.bf16.gmra.mxu0 %v1254
        %v1432 = vpop.f32.mrf.mxu0
        %v1433 = vadd.f32 0.0, %v1432
        %v1434 = vpop.f32.mrf.mxu0
        %v1435 = vadd.f32 0.0, %v1434
        %1436 = vmatmul.bf16.gmra.mxu0 %v1269
        %v1437 = vpop.f32.mrf.mxu0
        %v1438 = vadd.f32 0.0, %v1437
        %v1439 = vpop.f32.mrf.mxu0
        %1440 = vdwg.mxu0
        %1441 = vmatpush.bf16.msra.mxu0 0
        %1442 = vmatpush.bf16.msra.mxu0 0
        %1443 = vmatpush.bf16.msra.mxu0 0
        %1444 = vmatpush.bf16.msra.mxu0 0
        %1445 = vmatpush.bf16.msra.mxu0 0
        %1446 = vmatpush.bf16.msra.mxu0 0
        %1447 = vmatpush.bf16.msra.mxu0 %v1385
        %1448 = vmatpush.bf16.msra.mxu0 %v1352
        %1449 = vmatmul.bf16.gmra.mxu0 %v1375
        %v1450 = vpop.f32.mrf.mxu0
        %v1451 = vadd.f32 %v1433, %v1450
        %v1452 = vpop.f32.mrf.mxu0
        %v1453 = vadd.f32 %v1435, %v1452
        %1454 = vmatmul.bf16.gmra.mxu0 %v1378
        %v1455 = vpop.f32.mrf.mxu0
        %v1456 = vadd.f32 %v1438, %v1455
        %v1457 = vpop.f32.mrf.mxu0
        %1458 = vdwg.mxu0
        %v1459 = vpack.c.b16 %v1235, %v1235
        %v1460 = vpack.c.b16 %v1236, %v1236
        %v1483 = vunpack.c.l.b16 %v1186
        %v1484 = vunpack.c.h.b16 %v1186
        %v1485 = vunpack.c.l.b16 %v1187
        %v1486 = vunpack.c.h.b16 %v1187
        %v1487 = vunpack.c.l.b16 %v1188
        %v1488 = vunpack.c.h.b16 %v1188
        %v1489 = vunpack.c.l.b16 %v1189
        %v1490 = vunpack.c.h.b16 %v1189
        %v1491 = vunpack.c.l.b16 %v1190
        %v1492 = vunpack.c.h.b16 %v1190
        %v1493 = vunpack.c.l.b16 %v1191
        %v1494 = vunpack.c.h.b16 %v1191
        %v1495 = vunpack.c.l.b16 %v1192
        %v1496 = vunpack.c.h.b16 %v1192
        %v1497 = vunpack.c.l.b16 %v1193
        %v1498 = vunpack.c.h.b16 %v1193
        %v1499 = vunpack.c.l.b16 %v1194
        %v1500 = vunpack.c.h.b16 %v1194
        %v1501 = vunpack.c.l.b16 %v1195
        %v1502 = vunpack.c.h.b16 %v1195
        %v1503 = vunpack.c.l.b16 %v1196
        %v1504 = vunpack.c.h.b16 %v1196
        %v1505 = vunpack.c.l.b16 %v1197
        %v1506 = vunpack.c.h.b16 %v1197
        %v1507 = vunpack.c.l.b16 %v1198
        %v1508 = vunpack.c.h.b16 %v1198
        %v1509 = vunpack.c.l.b16 %v1199
        %v1510 = vunpack.c.h.b16 %v1199
        %v1511 = vunpack.c.l.b16 %v1200
        %v1512 = vunpack.c.h.b16 %v1200
        %v1513 = vunpack.c.l.b16 %v1201
        %v1514 = vunpack.c.h.b16 %v1201
        %v1515 = vunpack.c.l.b16 %v1202
        %v1516 = vunpack.c.h.b16 %v1202
        %v1517 = vunpack.c.l.b16 %v1203
        %v1518 = vunpack.c.h.b16 %v1203
        %v1519 = vunpack.c.l.b16 %v1204
        %v1520 = vunpack.c.h.b16 %v1204
        %v1521 = vunpack.c.l.b16 %v1205
        %v1522 = vunpack.c.h.b16 %v1205
        %v1523 = vpack.c.b16 %v1485, %v1483
        %v1524 = vpack.c.b16 %v1486, %v1484
        %v1525 = vpack.c.b16 %v1489, %v1487
        %v1526 = vpack.c.b16 %v1490, %v1488
        %v1527 = vpack.c.b16 %v1493, %v1491
        %v1528 = vpack.c.b16 %v1494, %v1492
        %v1529 = vpack.c.b16 %v1497, %v1495
        %v1530 = vpack.c.b16 %v1498, %v1496
        %v1531 = vpack.c.b16 %v1501, %v1499
        %v1532 = vpack.c.b16 %v1502, %v1500
        %v1533 = vpack.c.b16 %v1505, %v1503
        %v1534 = vpack.c.b16 %v1506, %v1504
        %v1535 = vpack.c.b16 %v1509, %v1507
        %v1536 = vpack.c.b16 %v1510, %v1508
        %v1537 = vpack.c.b16 %v1513, %v1511
        %v1538 = vpack.c.b16 %v1514, %v1512
        %v1539 = vpack.c.b16 %v1517, %v1515
        %v1540 = vpack.c.b16 %v1518, %v1516
        %v1541 = vpack.c.b16 %v1521, %v1519
        %v1542 = vpack.c.b16 %v1522, %v1520
        %v1561 = vsel %vm1373, %v1240, 0
        %v1564 = vsel %vm1373, %v1460, 0
        %v1567 = vsel %vm1380, %v1541, 0
        %v1570 = vsel %vm1380, %v1542, 0
        %1572 = vmatpush.bf16.msra.mxu0 %v1537
        %1573 = vmatpush.bf16.msra.mxu0 %v1535
        %1574 = vmatpush.bf16.msra.mxu0 %v1533
        %1575 = vmatpush.bf16.msra.mxu0 %v1531
        %1576 = vmatpush.bf16.msra.mxu0 %v1529
        %1577 = vmatpush.bf16.msra.mxu0 %v1527
        %1578 = vmatpush.bf16.msra.mxu0 %v1525
        %1579 = vmatpush.bf16.msra.mxu0 %v1523
        %1580 = vmatmul.bf16.gmra.mxu0 %v1239
        %v1581 = vpop.f32.mrf.mxu0
        %v1582 = vadd.f32 %v1415, %v1581
        %v1583 = vpop.f32.mrf.mxu0
        %v1584 = vadd.f32 %v1417, %v1583
        %1585 = vmatmul.bf16.gmra.mxu0 %v1459
        %v1586 = vpop.f32.mrf.mxu0
        %v1587 = vadd.f32 %v1420, %v1586
        %v1588 = vpop.f32.mrf.mxu0
        %1589 = vdwg.mxu0
        %1590 = vmatpush.bf16.msra.mxu0 0
        %1591 = vmatpush.bf16.msra.mxu0 0
        %1592 = vmatpush.bf16.msra.mxu0 0
        %1593 = vmatpush.bf16.msra.mxu0 0
        %1594 = vmatpush.bf16.msra.mxu0 0
        %1595 = vmatpush.bf16.msra.mxu0 0
        %1596 = vmatpush.bf16.msra.mxu0 %v1567
        %1597 = vmatpush.bf16.msra.mxu0 %v1539
        %1598 = vmatmul.bf16.gmra.mxu0 %v1561
        %v1599 = vpop.f32.mrf.mxu0
        %v1600 = vadd.f32 %v1582, %v1599
        %v1601 = vpop.f32.mrf.mxu0
        %v1602 = vadd.f32 %v1584, %v1601
        %1603 = vmatmul.bf16.gmra.mxu0 %v1564
        %v1604 = vpop.f32.mrf.mxu0
        %v1605 = vadd.f32 %v1587, %v1604
        %v1606 = vpop.f32.mrf.mxu0
        %1607 = vdwg.mxu0
        %1608 = vmatpush.bf16.msra.mxu0 %v1538
        %1609 = vmatpush.bf16.msra.mxu0 %v1536
        %1610 = vmatpush.bf16.msra.mxu0 %v1534
        %1611 = vmatpush.bf16.msra.mxu0 %v1532
        %1612 = vmatpush.bf16.msra.mxu0 %v1530
        %1613 = vmatpush.bf16.msra.mxu0 %v1528
        %1614 = vmatpush.bf16.msra.mxu0 %v1526
        %1615 = vmatpush.bf16.msra.mxu0 %v1524
        %1616 = vmatmul.bf16.gmra.mxu0 %v1239
        %v1617 = vpop.f32.mrf.mxu0
        %v1618 = vadd.f32 %v1451, %v1617
        %v1619 = vpop.f32.mrf.mxu0
        %v1620 = vadd.f32 %v1453, %v1619
        %1621 = vmatmul.bf16.gmra.mxu0 %v1459
        %v1622 = vpop.f32.mrf.mxu0
        %v1623 = vadd.f32 %v1456, %v1622
        %v1624 = vpop.f32.mrf.mxu0
        %1625 = vdwg.mxu0
        %1626 = vmatpush.bf16.msra.mxu0 0
        %1627 = vmatpush.bf16.msra.mxu0 0
        %1628 = vmatpush.bf16.msra.mxu0 0
        %1629 = vmatpush.bf16.msra.mxu0 0
        %1630 = vmatpush.bf16.msra.mxu0 0
        %1631 = vmatpush.bf16.msra.mxu0 0
        %1632 = vmatpush.bf16.msra.mxu0 %v1570
        %1633 = vmatpush.bf16.msra.mxu0 %v1540
        %1634 = vmatmul.bf16.gmra.mxu0 %v1561
        %v1635 = vpop.f32.mrf.mxu0
        %v1636 = vadd.f32 %v1618, %v1635
        %v1637 = vpop.f32.mrf.mxu0
        %v1638 = vadd.f32 %v1620, %v1637
        %1639 = vmatmul.bf16.gmra.mxu0 %v1564
        %v1640 = vpop.f32.mrf.mxu0
        %v1641 = vadd.f32 %v1623, %v1640
        %v1642 = vpop.f32.mrf.mxu0
        %1643 = vdwg.mxu0
        %s1644 = scalar_lea.vmem [#allocation10], 320
        %v1645 = vld [vmem:[%s1644] sm:$0xff]
        %v1646 = vld [vmem:[%s1644 + $0x8] sm:$0xff]
        %v1647 = vld [vmem:[%s1644 + $0x10] sm:$0xff]
        %v1648 = vld [vmem:[%s1644 + $0x18] sm:$0xff]
        %v1649 = vld [vmem:[%s1644 + $0x20] sm:$0xff]
        %v1650 = vld [vmem:[%s1644 + $0x28] sm:$0xff]
        %v1651 = vld [vmem:[%s1644 + $0x30] sm:$0xff]
        %v1652 = vld [vmem:[%s1644 + $0x38] sm:$0xff]
        %v1653 = vld [vmem:[%s1644 + $0x40] sm:$0xff]
        %v1654 = vld [vmem:[%s1644 + $0x48] sm:$0xff]
        %v1655 = vld [vmem:[%s1644 + $0x50] sm:$0xff]
        %v1656 = vld [vmem:[%s1644 + $0x58] sm:$0xff]
        %v1657 = vld [vmem:[%s1644 + $0x60] sm:$0xff]
        %v1658 = vld [vmem:[%s1644 + $0x68] sm:$0xff]
        %v1659 = vld [vmem:[%s1644 + $0x70] sm:$0xff]
        %v1660 = vld [vmem:[%s1644 + $0x78] sm:$0xff]
        %v1661 = vld [vmem:[%s1644 + $0x80] sm:$0xff]
        %v1662 = vld [vmem:[%s1644 + $0x88] sm:$0xff]
        %v1663 = vld [vmem:[%s1644 + $0x90] sm:$0xff]
        %v1664 = vld [vmem:[%s1644 + $0x98] sm:$0x33]
        %v1665 = vrot.slane %v1239, 1
        %v1666 = vrot.slane %v1241, 1
        %v1667 = vsel %vm654, %v1665, %v1666
        %v1668 = vrot.slane %v1240, 1
        %v1669 = vrot.slane %v1242, 1
        %v1670 = vsel %vm654, %v1668, %v1669
        %v1693 = vunpack.c.l.b16 %v1645
        %v1694 = vunpack.c.h.b16 %v1645
        %v1695 = vunpack.c.l.b16 %v1646
        %v1696 = vunpack.c.h.b16 %v1646
        %v1697 = vunpack.c.l.b16 %v1647
        %v1698 = vunpack.c.h.b16 %v1647
        %v1699 = vunpack.c.l.b16 %v1648
        %v1700 = vunpack.c.h.b16 %v1648
        %v1701 = vunpack.c.l.b16 %v1649
        %v1702 = vunpack.c.h.b16 %v1649
        %v1703 = vunpack.c.l.b16 %v1650
        %v1704 = vunpack.c.h.b16 %v1650
        %v1705 = vunpack.c.l.b16 %v1651
        %v1706 = vunpack.c.h.b16 %v1651
        %v1707 = vunpack.c.l.b16 %v1652
        %v1708 = vunpack.c.h.b16 %v1652
        %v1709 = vunpack.c.l.b16 %v1653
        %v1710 = vunpack.c.h.b16 %v1653
        %v1711 = vunpack.c.l.b16 %v1654
        %v1712 = vunpack.c.h.b16 %v1654
        %v1713 = vunpack.c.l.b16 %v1655
        %v1714 = vunpack.c.h.b16 %v1655
        %v1715 = vunpack.c.l.b16 %v1656
        %v1716 = vunpack.c.h.b16 %v1656
        %v1717 = vunpack.c.l.b16 %v1657
        %v1718 = vunpack.c.h.b16 %v1657
        %v1719 = vunpack.c.l.b16 %v1658
        %v1720 = vunpack.c.h.b16 %v1658
        %v1721 = vunpack.c.l.b16 %v1659
        %v1722 = vunpack.c.h.b16 %v1659
        %v1723 = vunpack.c.l.b16 %v1660
        %v1724 = vunpack.c.h.b16 %v1660
        %v1725 = vunpack.c.l.b16 %v1661
        %v1726 = vunpack.c.h.b16 %v1661
        %v1727 = vunpack.c.l.b16 %v1662
        %v1728 = vunpack.c.h.b16 %v1662
        %v1729 = vunpack.c.l.b16 %v1663
        %v1730 = vunpack.c.h.b16 %v1663
        %v1731 = vunpack.c.l.b16 %v1664
        %v1732 = vunpack.c.h.b16 %v1664
        %v1733 = vpack.c.b16 %v1695, %v1693
        %v1734 = vpack.c.b16 %v1696, %v1694
        %v1735 = vpack.c.b16 %v1699, %v1697
        %v1736 = vpack.c.b16 %v1700, %v1698
        %v1737 = vpack.c.b16 %v1703, %v1701
        %v1738 = vpack.c.b16 %v1704, %v1702
        %v1739 = vpack.c.b16 %v1707, %v1705
        %v1740 = vpack.c.b16 %v1708, %v1706
        %v1741 = vpack.c.b16 %v1711, %v1709
        %v1742 = vpack.c.b16 %v1712, %v1710
        %v1743 = vpack.c.b16 %v1715, %v1713
        %v1744 = vpack.c.b16 %v1716, %v1714
        %v1745 = vpack.c.b16 %v1719, %v1717
        %v1746 = vpack.c.b16 %v1720, %v1718
        %v1747 = vpack.c.b16 %v1723, %v1721
        %v1748 = vpack.c.b16 %v1724, %v1722
        %v1749 = vpack.c.b16 %v1727, %v1725
        %v1750 = vpack.c.b16 %v1728, %v1726
        %v1751 = vpack.c.b16 %v1731, %v1729
        %v1752 = vpack.c.b16 %v1732, %v1730
        %v1772 = vsel %vm1373, %v1670, 0
        %v1775 = vsel %vm1373, %v1669, 0
        %v1778 = vsel %vm1380, %v1751, 0
        %v1781 = vsel %vm1380, %v1752, 0
        %1783 = vmatpush.bf16.msra.mxu0 %v1747
        %1784 = vmatpush.bf16.msra.mxu0 %v1745
        %1785 = vmatpush.bf16.msra.mxu0 %v1743
        %1786 = vmatpush.bf16.msra.mxu0 %v1741
        %1787 = vmatpush.bf16.msra.mxu0 %v1739
        %1788 = vmatpush.bf16.msra.mxu0 %v1737
        %1789 = vmatpush.bf16.msra.mxu0 %v1735
        %1790 = vmatpush.bf16.msra.mxu0 %v1733
        %1791 = vmatmul.bf16.gmra.mxu0 %v1667
        %v1792 = vpop.f32.mrf.mxu0
        %v1793 = vadd.f32 0.0, %v1792
        %v1794 = vpop.f32.mrf.mxu0
        %v1795 = vadd.f32 0.0, %v1794
        %1796 = vmatmul.bf16.gmra.mxu0 %v1666
        %v1797 = vpop.f32.mrf.mxu0
        %v1798 = vadd.f32 0.0, %v1797
        %v1799 = vpop.f32.mrf.mxu0
        %1800 = vdwg.mxu0
        %1801 = vmatpush.bf16.msra.mxu0 0
        %1802 = vmatpush.bf16.msra.mxu0 0
        %1803 = vmatpush.bf16.msra.mxu0 0
        %1804 = vmatpush.bf16.msra.mxu0 0
        %1805 = vmatpush.bf16.msra.mxu0 0
        %1806 = vmatpush.bf16.msra.mxu0 0
        %1807 = vmatpush.bf16.msra.mxu0 %v1778
        %1808 = vmatpush.bf16.msra.mxu0 %v1749
        %1809 = vmatmul.bf16.gmra.mxu0 %v1772
        %v1810 = vpop.f32.mrf.mxu0
        %v1811 = vadd.f32 %v1793, %v1810
        %v1812 = vpop.f32.mrf.mxu0
        %v1813 = vadd.f32 %v1795, %v1812
        %1814 = vmatmul.bf16.gmra.mxu0 %v1775
        %v1815 = vpop.f32.mrf.mxu0
        %v1816 = vadd.f32 %v1798, %v1815
        %v1817 = vpop.f32.mrf.mxu0
        %1818 = vdwg.mxu0
        %1819 = vmatpush.bf16.msra.mxu0 %v1748
        %1820 = vmatpush.bf16.msra.mxu0 %v1746
        %1821 = vmatpush.bf16.msra.mxu0 %v1744
        %1822 = vmatpush.bf16.msra.mxu0 %v1742
        %1823 = vmatpush.bf16.msra.mxu0 %v1740
        %1824 = vmatpush.bf16.msra.mxu0 %v1738
        %1825 = vmatpush.bf16.msra.mxu0 %v1736
        %1826 = vmatpush.bf16.msra.mxu0 %v1734
        %1827 = vmatmul.bf16.gmra.mxu0 %v1667
        %v1828 = vpop.f32.mrf.mxu0
        %v1829 = vadd.f32 0.0, %v1828
        %v1830 = vpop.f32.mrf.mxu0
        %v1831 = vadd.f32 0.0, %v1830
        %1832 = vmatmul.bf16.gmra.mxu0 %v1666
        %v1833 = vpop.f32.mrf.mxu0
        %v1834 = vadd.f32 0.0, %v1833
        %v1835 = vpop.f32.mrf.mxu0
        %1836 = vdwg.mxu0
        %1837 = vmatpush.bf16.msra.mxu0 0
        %1838 = vmatpush.bf16.msra.mxu0 0
        %1839 = vmatpush.bf16.msra.mxu0 0
        %1840 = vmatpush.bf16.msra.mxu0 0
        %1841 = vmatpush.bf16.msra.mxu0 0
        %1842 = vmatpush.bf16.msra.mxu0 0
        %1843 = vmatpush.bf16.msra.mxu0 %v1781
        %1844 = vmatpush.bf16.msra.mxu0 %v1750
        %1845 = vmatmul.bf16.gmra.mxu0 %v1772
        %v1846 = vpop.f32.mrf.mxu0
        %v1847 = vadd.f32 %v1829, %v1846
        %v1848 = vpop.f32.mrf.mxu0
        %v1849 = vadd.f32 %v1831, %v1848
        %1850 = vmatmul.bf16.gmra.mxu0 %v1775
        %v1851 = vpop.f32.mrf.mxu0
        %v1852 = vadd.f32 %v1834, %v1851
        %v1853 = vpop.f32.mrf.mxu0
        %1854 = vdwg.mxu0
        %v1855 = vadd.f32 %v1600, %v1811
        %v1856 = vadd.f32 %v1636, %v1847
        %v1857 = vadd.f32 %v1602, %v1813
        %v1858 = vadd.f32 %v1638, %v1849
        %v1859 = vadd.f32 %v1605, %v1816
        %v1860 = vadd.f32 %v1641, %v1852
        %v1862 = vperm.slane %v458, 0
        %v1863 = vperm.slane %v458, 1
        %v1866 = vadd.f32 %v1855, %v1862
        %v1867 = vadd.f32 %v1856, %v1863
        %v1868 = vadd.f32 %v1857, %v1862
        %v1869 = vadd.f32 %v1858, %v1863
        %v1870 = vadd.f32 %v1859, %v1862
        %v1871 = vadd.f32 %v1860, %v1863
        %v1872 = vmax.f32 %v1866, 0.0
        %v1873 = vmax.f32 %v1867, 0.0
        %v1874 = vmax.f32 %v1868, 0.0
        %v1875 = vmax.f32 %v1869, 0.0
        %v1876 = vmax.f32 %v1870, 0.0
        %v1877 = vmax.f32 %v1871, 0.0
        %1884 = vrot.lane.b32.xlu0 %v1872, 120
        %v1885 = vpop.permute.xlu0 %1884
        %1886 = vrot.lane.b32.xlu0 %v1873, 120
        %v1887 = vpop.permute.xlu0 %1886
        %1888 = vrot.lane.b32.xlu0 %v1874, 120
        %v1889 = vpop.permute.xlu0 %1888
        %1890 = vrot.lane.b32.xlu0 %v1875, 120
        %v1891 = vpop.permute.xlu0 %1890
        %1892 = vrot.lane.b32.xlu0 %v1876, 120
        %v1893 = vpop.permute.xlu0 %1892
        %1894 = vrot.lane.b32.xlu0 %v1877, 120
        %v1895 = vpop.permute.xlu0 %1894
        %vm1896 = vcmask 982016
        %v1897 = vsel %vm1896, %v1885, %v1887
        %v1898 = vsel %vm1896, %v1889, %v1891
        %v1899 = vsel %vm1896, %v1893, %v1895
        %v1906 = vmax.f32 %v1872, %v1897
        %v1907 = vmax.f32 %v1873, %v1887
        %v1908 = vmax.f32 %v1874, %v1898
        %v1909 = vmax.f32 %v1875, %v1891
        %v1910 = vmax.f32 %v1876, %v1899
        %v1911 = vmax.f32 %v1877, %v1895
        %v1914 = vrot.slane %v1906, 1
        %v1915 = vrot.slane %v1907, 1
        %v1918 = vmax.f32 %v1906, %v1914
        %v1919 = vmax.f32 %v1907, %v1915
        %v1920 = vld [vmem:[#allocation13] sm:$0xff]
        %v1921 = vld [vmem:[#allocation13 + $0x8] sm:$0xff]
        %v1922 = vld [vmem:[#allocation13 + $0x10] sm:$0xff]
        %v1923 = vld [vmem:[#allocation13 + $0x18] sm:$0xff]
        %v1924 = vld [vmem:[#allocation13 + $0x20] sm:$0xff]
        %v1925 = vld [vmem:[#allocation13 + $0x28] sm:$0xff]
        %v1926 = vld [vmem:[#allocation13 + $0x30] sm:$0xff]
        %v1927 = vld [vmem:[#allocation13 + $0x38] sm:$0xff]
        %v1928 = vld [vmem:[#allocation13 + $0x40] sm:$0xff]
        %v1929 = vld [vmem:[#allocation13 + $0x48] sm:$0xff]
        %v1930 = vld [vmem:[#allocation13 + $0x50] sm:$0xff]
        %v1931 = vld [vmem:[#allocation13 + $0x58] sm:$0xff]
        %v1932 = vld [vmem:[#allocation13 + $0x60] sm:$0xff]
        %v1933 = vld [vmem:[#allocation13 + $0x68] sm:$0xff]
        %v1934 = vld [vmem:[#allocation13 + $0x70] sm:$0xff]
        %v1935 = vld [vmem:[#allocation13 + $0x78] sm:$0xff]
        %v1936 = vld [vmem:[#allocation13 + $0x80] sm:$0xff]
        %v1937 = vld [vmem:[#allocation13 + $0x88] sm:$0xff]
        %v1938 = vld [vmem:[#allocation13 + $0x90] sm:$0xff]
        %v1939 = vld [vmem:[#allocation13 + $0x98] sm:$0xff]
        %v1940 = vld [vmem:[#allocation13 + $0xa0] sm:$0xff]
        %v1941 = vld [vmem:[#allocation13 + $0xa8] sm:$0xff]
        %v1942 = vld [vmem:[#allocation13 + $0xb0] sm:$0xff]
        %vm1943 = vcmask 457728
        %v1945 = vsel %vm1943, %v1919, 0
        %1947 = vmatpush.msra.mxu0 %v1935
        %1948 = vmatpush.msra.mxu0 %v1934
        %1949 = vmatpush.msra.mxu0 %v1933
        %1950 = vmatpush.msra.mxu0 %v1932
        %1951 = vmatpush.msra.mxu0 %v1931
        %1952 = vmatpush.msra.mxu0 %v1930
        %1953 = vmatpush.msra.mxu0 %v1929
        %1954 = vmatpush.msra.mxu0 %v1928
        %1955 = vmatpush.msra.mxu0 %v1927
        %1956 = vmatpush.msra.mxu0 %v1926
        %1957 = vmatpush.msra.mxu0 %v1925
        %1958 = vmatpush.msra.mxu0 %v1924
        %1959 = vmatpush.msra.mxu0 %v1923
        %1960 = vmatpush.msra.mxu0 %v1922
        %1961 = vmatpush.msra.mxu0 %v1921
        %1962 = vmatpush.msra.mxu0 %v1920
        %1963 = vmatmul.f32.gmra.mxu0 %v1918
        %v1964 = vpop.f32.mrf.mxu0
        %v1965 = vadd.f32 0.0, %v1964
        %1966 = vdwg.mxu0
        %1967 = vmatpush.msra.mxu0 0.0
        %1968 = vmatpush.msra.mxu0 0.0
        %1969 = vmatpush.msra.mxu0 0.0
        %1970 = vmatpush.msra.mxu0 0.0
        %1971 = vmatpush.msra.mxu0 0.0
        %1972 = vmatpush.msra.mxu0 0.0
        %1973 = vmatpush.msra.mxu0 0.0
        %1974 = vmatpush.msra.mxu0 0.0
        %1975 = vmatpush.msra.mxu0 0.0
        %1976 = vmatpush.msra.mxu0 %v1942
        %1977 = vmatpush.msra.mxu0 %v1941
        %1978 = vmatpush.msra.mxu0 %v1940
        %1979 = vmatpush.msra.mxu0 %v1939
        %1980 = vmatpush.msra.mxu0 %v1938
        %1981 = vmatpush.msra.mxu0 %v1937
        %1982 = vmatpush.msra.mxu0 %v1936
        %1983 = vmatmul.f32.gmra.mxu0 %v1945
        %v1984 = vpop.f32.mrf.mxu0
        %v1985 = vadd.f32 %v1965, %v1984
        %1986 = vdwg.mxu0
        %v1987 = vadd.f32 %v459, %v1985
        %s1988 = scalar_lea.vmem [#allocation13], 184
        %v1989 = vld [vmem:[%s1988] sm:$0xff]
        %v1990 = vld [vmem:[%s1988 + $0x8] sm:$0xff]
        %v1991 = vld [vmem:[%s1988 + $0x10] sm:$0xff]
        %v1992 = vld [vmem:[%s1988 + $0x18] sm:$0xff]
        %v1993 = vld [vmem:[%s1988 + $0x20] sm:$0xff]
        %v1994 = vld [vmem:[%s1988 + $0x28] sm:$0xff]
        %v1995 = vld [vmem:[%s1988 + $0x30] sm:$0xff]
        %v1996 = vld [vmem:[%s1988 + $0x38] sm:$0xff]
        %v1997 = vld [vmem:[%s1988 + $0x40] sm:$0xff]
        %v1998 = vld [vmem:[%s1988 + $0x48] sm:$0xff]
        %v1999 = vld [vmem:[%s1988 + $0x50] sm:$0xff]
        %v2000 = vld [vmem:[%s1988 + $0x58] sm:$0xff]
        %v2001 = vld [vmem:[%s1988 + $0x60] sm:$0xff]
        %v2002 = vld [vmem:[%s1988 + $0x68] sm:$0xff]
        %v2003 = vld [vmem:[%s1988 + $0x70] sm:$0xff]
        %v2004 = vld [vmem:[%s1988 + $0x78] sm:$0xff]
        %v2005 = vld [vmem:[%s1988 + $0x80] sm:$0xff]
        %v2006 = vld [vmem:[%s1988 + $0x88] sm:$0xff]
        %v2007 = vld [vmem:[%s1988 + $0x90] sm:$0xff]
        %v2008 = vld [vmem:[%s1988 + $0x98] sm:$0xff]
        %v2009 = vld [vmem:[%s1988 + $0xa0] sm:$0xff]
        %v2010 = vld [vmem:[%s1988 + $0xa8] sm:$0xff]
        %v2011 = vld [vmem:[%s1988 + $0xb0] sm:$0xff]
        %v2013 = vrot.slane %v1918, 2
        %v2014 = vrot.slane %v1919, 2
        %v2016 = vsel %vm1943, %v2014, 0
        %2018 = vmatpush.msra.mxu0 %v2004
        %2019 = vmatpush.msra.mxu0 %v2003
        %2020 = vmatpush.msra.mxu0 %v2002
        %2021 = vmatpush.msra.mxu0 %v2001
        %2022 = vmatpush.msra.mxu0 %v2000
        %2023 = vmatpush.msra.mxu0 %v1999
        %2024 = vmatpush.msra.mxu0 %v1998
        %2025 = vmatpush.msra.mxu0 %v1997
        %2026 = vmatpush.msra.mxu0 %v1996
        %2027 = vmatpush.msra.mxu0 %v1995
        %2028 = vmatpush.msra.mxu0 %v1994
        %2029 = vmatpush.msra.mxu0 %v1993
        %2030 = vmatpush.msra.mxu0 %v1992
        %2031 = vmatpush.msra.mxu0 %v1991
        %2032 = vmatpush.msra.mxu0 %v1990
        %2033 = vmatpush.msra.mxu0 %v1989
        %2034 = vmatmul.f32.gmra.mxu0 %v2013
        %v2035 = vpop.f32.mrf.mxu0
        %v2036 = vadd.f32 0.0, %v2035
        %2037 = vdwg.mxu0
        %2038 = vmatpush.msra.mxu0 0.0
        %2039 = vmatpush.msra.mxu0 0.0
        %2040 = vmatpush.msra.mxu0 0.0
        %2041 = vmatpush.msra.mxu0 0.0
        %2042 = vmatpush.msra.mxu0 0.0
        %2043 = vmatpush.msra.mxu0 0.0
        %2044 = vmatpush.msra.mxu0 0.0
        %2045 = vmatpush.msra.mxu0 0.0
        %2046 = vmatpush.msra.mxu0 0.0
        %2047 = vmatpush.msra.mxu0 %v2011
        %2048 = vmatpush.msra.mxu0 %v2010
        %2049 = vmatpush.msra.mxu0 %v2009
        %2050 = vmatpush.msra.mxu0 %v2008
        %2051 = vmatpush.msra.mxu0 %v2007
        %2052 = vmatpush.msra.mxu0 %v2006
        %2053 = vmatpush.msra.mxu0 %v2005
        %2054 = vmatmul.f32.gmra.mxu0 %v2016
        %v2055 = vpop.f32.mrf.mxu0
        %v2056 = vadd.f32 %v2036, %v2055
        %2057 = vdwg.mxu0
        %v2058 = vadd.f32 %v1987, %v2056
        %s2059 = scalar_lea.vmem [#allocation13], 368
        %v2060 = vld [vmem:[%s2059] sm:$0xff]
        %v2061 = vld [vmem:[%s2059 + $0x8] sm:$0xff]
        %v2062 = vld [vmem:[%s2059 + $0x10] sm:$0xff]
        %v2063 = vld [vmem:[%s2059 + $0x18] sm:$0xff]
        %v2064 = vld [vmem:[%s2059 + $0x20] sm:$0xff]
        %v2065 = vld [vmem:[%s2059 + $0x28] sm:$0xff]
        %v2066 = vld [vmem:[%s2059 + $0x30] sm:$0xff]
        %v2067 = vld [vmem:[%s2059 + $0x38] sm:$0xff]
        %v2068 = vld [vmem:[%s2059 + $0x40] sm:$0xff]
        %v2069 = vld [vmem:[%s2059 + $0x48] sm:$0xff]
        %v2070 = vld [vmem:[%s2059 + $0x50] sm:$0xff]
        %v2071 = vld [vmem:[%s2059 + $0x58] sm:$0xff]
        %v2072 = vld [vmem:[%s2059 + $0x60] sm:$0xff]
        %v2073 = vld [vmem:[%s2059 + $0x68] sm:$0xff]
        %v2074 = vld [vmem:[%s2059 + $0x70] sm:$0xff]
        %v2075 = vld [vmem:[%s2059 + $0x78] sm:$0xff]
        %v2076 = vld [vmem:[%s2059 + $0x80] sm:$0xff]
        %v2077 = vld [vmem:[%s2059 + $0x88] sm:$0xff]
        %v2078 = vld [vmem:[%s2059 + $0x90] sm:$0xff]
        %v2079 = vld [vmem:[%s2059 + $0x98] sm:$0xff]
        %v2080 = vld [vmem:[%s2059 + $0xa0] sm:$0xff]
        %v2081 = vld [vmem:[%s2059 + $0xa8] sm:$0xff]
        %v2082 = vld [vmem:[%s2059 + $0xb0] sm:$0xff]
        %v2083 = vrot.slane %v1918, 4
        %v2084 = vrot.slane %v1919, 4
        %v2086 = vsel %vm1943, %v2084, 0
        %2088 = vmatpush.msra.mxu0 %v2075
        %2089 = vmatpush.msra.mxu0 %v2074
        %2090 = vmatpush.msra.mxu0 %v2073
        %2091 = vmatpush.msra.mxu0 %v2072
        %2092 = vmatpush.msra.mxu0 %v2071
        %2093 = vmatpush.msra.mxu0 %v2070
        %2094 = vmatpush.msra.mxu0 %v2069
        %2095 = vmatpush.msra.mxu0 %v2068
        %2096 = vmatpush.msra.mxu0 %v2067
        %2097 = vmatpush.msra.mxu0 %v2066
        %2098 = vmatpush.msra.mxu0 %v2065
        %2099 = vmatpush.msra.mxu0 %v2064
        %2100 = vmatpush.msra.mxu0 %v2063
        %2101 = vmatpush.msra.mxu0 %v2062
        %2102 = vmatpush.msra.mxu0 %v2061
        %2103 = vmatpush.msra.mxu0 %v2060
        %2104 = vmatmul.f32.gmra.mxu0 %v2083
        %v2105 = vpop.f32.mrf.mxu0
        %v2106 = vadd.f32 0.0, %v2105
        %2107 = vdwg.mxu0
        %2108 = vmatpush.msra.mxu0 0.0
        %2109 = vmatpush.msra.mxu0 0.0
        %2110 = vmatpush.msra.mxu0 0.0
        %2111 = vmatpush.msra.mxu0 0.0
        %2112 = vmatpush.msra.mxu0 0.0
        %2113 = vmatpush.msra.mxu0 0.0
        %2114 = vmatpush.msra.mxu0 0.0
        %2115 = vmatpush.msra.mxu0 0.0
        %2116 = vmatpush.msra.mxu0 0.0
        %2117 = vmatpush.msra.mxu0 %v2082
        %2118 = vmatpush.msra.mxu0 %v2081
        %2119 = vmatpush.msra.mxu0 %v2080
        %2120 = vmatpush.msra.mxu0 %v2079
        %2121 = vmatpush.msra.mxu0 %v2078
        %2122 = vmatpush.msra.mxu0 %v2077
        %2123 = vmatpush.msra.mxu0 %v2076
        %2124 = vmatmul.f32.gmra.mxu0 %v2086
        %v2125 = vpop.f32.mrf.mxu0
        %v2126 = vadd.f32 %v2106, %v2125
        %2127 = vdwg.mxu0
        %v2128 = vadd.f32 %v2058, %v2126
        %s2129 = scalar_lea.vmem [#allocation13], 552
        %v2130 = vld [vmem:[%s2129] sm:$0xff]
        %v2131 = vld [vmem:[%s2129 + $0x8] sm:$0xff]
        %v2132 = vld [vmem:[%s2129 + $0x10] sm:$0xff]
        %v2133 = vld [vmem:[%s2129 + $0x18] sm:$0xff]
        %v2134 = vld [vmem:[%s2129 + $0x20] sm:$0xff]
        %v2135 = vld [vmem:[%s2129 + $0x28] sm:$0xff]
        %v2136 = vld [vmem:[%s2129 + $0x30] sm:$0xff]
        %v2137 = vld [vmem:[%s2129 + $0x38] sm:$0xff]
        %v2138 = vld [vmem:[%s2129 + $0x40] sm:$0xff]
        %v2139 = vld [vmem:[%s2129 + $0x48] sm:$0xff]
        %v2140 = vld [vmem:[%s2129 + $0x50] sm:$0xff]
        %v2141 = vld [vmem:[%s2129 + $0x58] sm:$0xff]
        %v2142 = vld [vmem:[%s2129 + $0x60] sm:$0xff]
        %v2143 = vld [vmem:[%s2129 + $0x68] sm:$0xff]
        %v2144 = vld [vmem:[%s2129 + $0x70] sm:$0xff]
        %v2145 = vld [vmem:[%s2129 + $0x78] sm:$0xff]
        %v2146 = vld [vmem:[%s2129 + $0x80] sm:$0xff]
        %v2147 = vld [vmem:[%s2129 + $0x88] sm:$0xff]
        %v2148 = vld [vmem:[%s2129 + $0x90] sm:$0xff]
        %v2149 = vld [vmem:[%s2129 + $0x98] sm:$0xff]
        %v2150 = vld [vmem:[%s2129 + $0xa0] sm:$0xff]
        %v2151 = vld [vmem:[%s2129 + $0xa8] sm:$0xff]
        %v2152 = vld [vmem:[%s2129 + $0xb0] sm:$0xff]
        %v2153 = vrot.slane %v1918, 6
        %v2154 = vrot.slane %v1919, 6
        %v2156 = vsel %vm1943, %v2154, 0
        %2158 = vmatpush.msra.mxu0 %v2145
        %2159 = vmatpush.msra.mxu0 %v2144
        %2160 = vmatpush.msra.mxu0 %v2143
        %2161 = vmatpush.msra.mxu0 %v2142
        %2162 = vmatpush.msra.mxu0 %v2141
        %2163 = vmatpush.msra.mxu0 %v2140
        %2164 = vmatpush.msra.mxu0 %v2139
        %2165 = vmatpush.msra.mxu0 %v2138
        %2166 = vmatpush.msra.mxu0 %v2137
        %2167 = vmatpush.msra.mxu0 %v2136
        %2168 = vmatpush.msra.mxu0 %v2135
        %2169 = vmatpush.msra.mxu0 %v2134
        %2170 = vmatpush.msra.mxu0 %v2133
        %2171 = vmatpush.msra.mxu0 %v2132
        %2172 = vmatpush.msra.mxu0 %v2131
        %2173 = vmatpush.msra.mxu0 %v2130
        %2174 = vmatmul.f32.gmra.mxu0 %v2153
        %v2175 = vpop.f32.mrf.mxu0
        %v2176 = vadd.f32 0.0, %v2175
        %2177 = vdwg.mxu0
        %2178 = vmatpush.msra.mxu0 0.0
        %2179 = vmatpush.msra.mxu0 0.0
        %2180 = vmatpush.msra.mxu0 0.0
        %2181 = vmatpush.msra.mxu0 0.0
        %2182 = vmatpush.msra.mxu0 0.0
        %2183 = vmatpush.msra.mxu0 0.0
        %2184 = vmatpush.msra.mxu0 0.0
        %2185 = vmatpush.msra.mxu0 0.0
        %2186 = vmatpush.msra.mxu0 0.0
        %2187 = vmatpush.msra.mxu0 %v2152
        %2188 = vmatpush.msra.mxu0 %v2151
        %2189 = vmatpush.msra.mxu0 %v2150
        %2190 = vmatpush.msra.mxu0 %v2149
        %2191 = vmatpush.msra.mxu0 %v2148
        %2192 = vmatpush.msra.mxu0 %v2147
        %2193 = vmatpush.msra.mxu0 %v2146
        %2194 = vmatmul.f32.gmra.mxu0 %v2156
        %v2195 = vpop.f32.mrf.mxu0
        %v2196 = vadd.f32 %v2176, %v2195
        %2197 = vdwg.mxu0
        %v2198 = vadd.f32 %v2128, %v2196
        %v2201 = vrot.slane %v1908, 1
        %v2202 = vrot.slane %v1909, 1
        %v2205 = vmax.f32 %v1908, %v2201
        %v2206 = vmax.f32 %v1909, %v2202
        %s2207 = scalar_lea.vmem [#allocation13], 736
        %v2208 = vld [vmem:[%s2207] sm:$0xff]
        %v2209 = vld [vmem:[%s2207 + $0x8] sm:$0xff]
        %v2210 = vld [vmem:[%s2207 + $0x10] sm:$0xff]
        %v2211 = vld [vmem:[%s2207 + $0x18] sm:$0xff]
        %v2212 = vld [vmem:[%s2207 + $0x20] sm:$0xff]
        %v2213 = vld [vmem:[%s2207 + $0x28] sm:$0xff]
        %v2214 = vld [vmem:[%s2207 + $0x30] sm:$0xff]
        %v2215 = vld [vmem:[%s2207 + $0x38] sm:$0xff]
        %v2216 = vld [vmem:[%s2207 + $0x40] sm:$0xff]
        %v2217 = vld [vmem:[%s2207 + $0x48] sm:$0xff]
        %v2218 = vld [vmem:[%s2207 + $0x50] sm:$0xff]
        %v2219 = vld [vmem:[%s2207 + $0x58] sm:$0xff]
        %v2220 = vld [vmem:[%s2207 + $0x60] sm:$0xff]
        %v2221 = vld [vmem:[%s2207 + $0x68] sm:$0xff]
        %v2222 = vld [vmem:[%s2207 + $0x70] sm:$0xff]
        %v2223 = vld [vmem:[%s2207 + $0x78] sm:$0xff]
        %v2224 = vld [vmem:[%s2207 + $0x80] sm:$0xff]
        %v2225 = vld [vmem:[%s2207 + $0x88] sm:$0xff]
        %v2226 = vld [vmem:[%s2207 + $0x90] sm:$0xff]
        %v2227 = vld [vmem:[%s2207 + $0x98] sm:$0xff]
        %v2228 = vld [vmem:[%s2207 + $0xa0] sm:$0xff]
        %v2229 = vld [vmem:[%s2207 + $0xa8] sm:$0xff]
        %v2230 = vld [vmem:[%s2207 + $0xb0] sm:$0xff]
        %v2232 = vsel %vm1943, %v2206, 0
        %2234 = vmatpush.msra.mxu0 %v2223
        %2235 = vmatpush.msra.mxu0 %v2222
        %2236 = vmatpush.msra.mxu0 %v2221
        %2237 = vmatpush.msra.mxu0 %v2220
        %2238 = vmatpush.msra.mxu0 %v2219
        %2239 = vmatpush.msra.mxu0 %v2218
        %2240 = vmatpush.msra.mxu0 %v2217
        %2241 = vmatpush.msra.mxu0 %v2216
        %2242 = vmatpush.msra.mxu0 %v2215
        %2243 = vmatpush.msra.mxu0 %v2214
        %2244 = vmatpush.msra.mxu0 %v2213
        %2245 = vmatpush.msra.mxu0 %v2212
        %2246 = vmatpush.msra.mxu0 %v2211
        %2247 = vmatpush.msra.mxu0 %v2210
        %2248 = vmatpush.msra.mxu0 %v2209
        %2249 = vmatpush.msra.mxu0 %v2208
        %2250 = vmatmul.f32.gmra.mxu0 %v2205
        %v2251 = vpop.f32.mrf.mxu0
        %v2252 = vadd.f32 0.0, %v2251
        %2253 = vdwg.mxu0
        %2254 = vmatpush.msra.mxu0 0.0
        %2255 = vmatpush.msra.mxu0 0.0
        %2256 = vmatpush.msra.mxu0 0.0
        %2257 = vmatpush.msra.mxu0 0.0
        %2258 = vmatpush.msra.mxu0 0.0
        %2259 = vmatpush.msra.mxu0 0.0
        %2260 = vmatpush.msra.mxu0 0.0
        %2261 = vmatpush.msra.mxu0 0.0
        %2262 = vmatpush.msra.mxu0 0.0
        %2263 = vmatpush.msra.mxu0 %v2230
        %2264 = vmatpush.msra.mxu0 %v2229
        %2265 = vmatpush.msra.mxu0 %v2228
        %2266 = vmatpush.msra.mxu0 %v2227
        %2267 = vmatpush.msra.mxu0 %v2226
        %2268 = vmatpush.msra.mxu0 %v2225
        %2269 = vmatpush.msra.mxu0 %v2224
        %2270 = vmatmul.f32.gmra.mxu0 %v2232
        %v2271 = vpop.f32.mrf.mxu0
        %v2272 = vadd.f32 %v2252, %v2271
        %2273 = vdwg.mxu0
        %v2274 = vadd.f32 %v2198, %v2272
        %s2275 = scalar_lea.vmem [#allocation13], 920
        %v2276 = vld [vmem:[%s2275] sm:$0xff]
        %v2277 = vld [vmem:[%s2275 + $0x8] sm:$0xff]
        %v2278 = vld [vmem:[%s2275 + $0x10] sm:$0xff]
        %v2279 = vld [vmem:[%s2275 + $0x18] sm:$0xff]
        %v2280 = vld [vmem:[%s2275 + $0x20] sm:$0xff]
        %v2281 = vld [vmem:[%s2275 + $0x28] sm:$0xff]
        %v2282 = vld [vmem:[%s2275 + $0x30] sm:$0xff]
        %v2283 = vld [vmem:[%s2275 + $0x38] sm:$0xff]
        %v2284 = vld [vmem:[%s2275 + $0x40] sm:$0xff]
        %v2285 = vld [vmem:[%s2275 + $0x48] sm:$0xff]
        %v2286 = vld [vmem:[%s2275 + $0x50] sm:$0xff]
        %v2287 = vld [vmem:[%s2275 + $0x58] sm:$0xff]
        %v2288 = vld [vmem:[%s2275 + $0x60] sm:$0xff]
        %v2289 = vld [vmem:[%s2275 + $0x68] sm:$0xff]
        %v2290 = vld [vmem:[%s2275 + $0x70] sm:$0xff]
        %v2291 = vld [vmem:[%s2275 + $0x78] sm:$0xff]
        %v2292 = vld [vmem:[%s2275 + $0x80] sm:$0xff]
        %v2293 = vld [vmem:[%s2275 + $0x88] sm:$0xff]
        %v2294 = vld [vmem:[%s2275 + $0x90] sm:$0xff]
        %v2295 = vld [vmem:[%s2275 + $0x98] sm:$0xff]
        %v2296 = vld [vmem:[%s2275 + $0xa0] sm:$0xff]
        %v2297 = vld [vmem:[%s2275 + $0xa8] sm:$0xff]
        %v2298 = vld [vmem:[%s2275 + $0xb0] sm:$0xff]
        %v2300 = vrot.slane %v2205, 2
        %v2301 = vrot.slane %v2206, 2
        %v2303 = vsel %vm1943, %v2301, 0
        %2305 = vmatpush.msra.mxu0 %v2291
        %2306 = vmatpush.msra.mxu0 %v2290
        %2307 = vmatpush.msra.mxu0 %v2289
        %2308 = vmatpush.msra.mxu0 %v2288
        %2309 = vmatpush.msra.mxu0 %v2287
        %2310 = vmatpush.msra.mxu0 %v2286
        %2311 = vmatpush.msra.mxu0 %v2285
        %2312 = vmatpush.msra.mxu0 %v2284
        %2313 = vmatpush.msra.mxu0 %v2283
        %2314 = vmatpush.msra.mxu0 %v2282
        %2315 = vmatpush.msra.mxu0 %v2281
        %2316 = vmatpush.msra.mxu0 %v2280
        %2317 = vmatpush.msra.mxu0 %v2279
        %2318 = vmatpush.msra.mxu0 %v2278
        %2319 = vmatpush.msra.mxu0 %v2277
        %2320 = vmatpush.msra.mxu0 %v2276
        %2321 = vmatmul.f32.gmra.mxu0 %v2300
        %v2322 = vpop.f32.mrf.mxu0
        %v2323 = vadd.f32 0.0, %v2322
        %2324 = vdwg.mxu0
        %2325 = vmatpush.msra.mxu0 0.0
        %2326 = vmatpush.msra.mxu0 0.0
        %2327 = vmatpush.msra.mxu0 0.0
        %2328 = vmatpush.msra.mxu0 0.0
        %2329 = vmatpush.msra.mxu0 0.0
        %2330 = vmatpush.msra.mxu0 0.0
        %2331 = vmatpush.msra.mxu0 0.0
        %2332 = vmatpush.msra.mxu0 0.0
        %2333 = vmatpush.msra.mxu0 0.0
        %2334 = vmatpush.msra.mxu0 %v2298
        %2335 = vmatpush.msra.mxu0 %v2297
        %2336 = vmatpush.msra.mxu0 %v2296
        %2337 = vmatpush.msra.mxu0 %v2295
        %2338 = vmatpush.msra.mxu0 %v2294
        %2339 = vmatpush.msra.mxu0 %v2293
        %2340 = vmatpush.msra.mxu0 %v2292
        %2341 = vmatmul.f32.gmra.mxu0 %v2303
        %v2342 = vpop.f32.mrf.mxu0
        %v2343 = vadd.f32 %v2323, %v2342
        %2344 = vdwg.mxu0
        %v2345 = vadd.f32 %v2274, %v2343
        %s2346 = scalar_lea.vmem [#allocation13], 1104
        %v2347 = vld [vmem:[%s2346] sm:$0xff]
        %v2348 = vld [vmem:[%s2346 + $0x8] sm:$0xff]
        %v2349 = vld [vmem:[%s2346 + $0x10] sm:$0xff]
        %v2350 = vld [vmem:[%s2346 + $0x18] sm:$0xff]
        %v2351 = vld [vmem:[%s2346 + $0x20] sm:$0xff]
        %v2352 = vld [vmem:[%s2346 + $0x28] sm:$0xff]
        %v2353 = vld [vmem:[%s2346 + $0x30] sm:$0xff]
        %v2354 = vld [vmem:[%s2346 + $0x38] sm:$0xff]
        %v2355 = vld [vmem:[%s2346 + $0x40] sm:$0xff]
        %v2356 = vld [vmem:[%s2346 + $0x48] sm:$0xff]
        %v2357 = vld [vmem:[%s2346 + $0x50] sm:$0xff]
        %v2358 = vld [vmem:[%s2346 + $0x58] sm:$0xff]
        %v2359 = vld [vmem:[%s2346 + $0x60] sm:$0xff]
        %v2360 = vld [vmem:[%s2346 + $0x68] sm:$0xff]
        %v2361 = vld [vmem:[%s2346 + $0x70] sm:$0xff]
        %v2362 = vld [vmem:[%s2346 + $0x78] sm:$0xff]
        %v2363 = vld [vmem:[%s2346 + $0x80] sm:$0xff]
        %v2364 = vld [vmem:[%s2346 + $0x88] sm:$0xff]
        %v2365 = vld [vmem:[%s2346 + $0x90] sm:$0xff]
        %v2366 = vld [vmem:[%s2346 + $0x98] sm:$0xff]
        %v2367 = vld [vmem:[%s2346 + $0xa0] sm:$0xff]
        %v2368 = vld [vmem:[%s2346 + $0xa8] sm:$0xff]
        %v2369 = vld [vmem:[%s2346 + $0xb0] sm:$0xff]
        %v2370 = vrot.slane %v2205, 4
        %v2371 = vrot.slane %v2206, 4
        %v2373 = vsel %vm1943, %v2371, 0
        %2375 = vmatpush.msra.mxu0 %v2362
        %2376 = vmatpush.msra.mxu0 %v2361
        %2377 = vmatpush.msra.mxu0 %v2360
        %2378 = vmatpush.msra.mxu0 %v2359
        %2379 = vmatpush.msra.mxu0 %v2358
        %2380 = vmatpush.msra.mxu0 %v2357
        %2381 = vmatpush.msra.mxu0 %v2356
        %2382 = vmatpush.msra.mxu0 %v2355
        %2383 = vmatpush.msra.mxu0 %v2354
        %2384 = vmatpush.msra.mxu0 %v2353
        %2385 = vmatpush.msra.mxu0 %v2352
        %2386 = vmatpush.msra.mxu0 %v2351
        %2387 = vmatpush.msra.mxu0 %v2350
        %2388 = vmatpush.msra.mxu0 %v2349
        %2389 = vmatpush.msra.mxu0 %v2348
        %2390 = vmatpush.msra.mxu0 %v2347
        %2391 = vmatmul.f32.gmra.mxu0 %v2370
        %v2392 = vpop.f32.mrf.mxu0
        %v2393 = vadd.f32 0.0, %v2392
        %2394 = vdwg.mxu0
        %2395 = vmatpush.msra.mxu0 0.0
        %2396 = vmatpush.msra.mxu0 0.0
        %2397 = vmatpush.msra.mxu0 0.0
        %2398 = vmatpush.msra.mxu0 0.0
        %2399 = vmatpush.msra.mxu0 0.0
        %2400 = vmatpush.msra.mxu0 0.0
        %2401 = vmatpush.msra.mxu0 0.0
        %2402 = vmatpush.msra.mxu0 0.0
        %2403 = vmatpush.msra.mxu0 0.0
        %2404 = vmatpush.msra.mxu0 %v2369
        %2405 = vmatpush.msra.mxu0 %v2368
        %2406 = vmatpush.msra.mxu0 %v2367
        %2407 = vmatpush.msra.mxu0 %v2366
        %2408 = vmatpush.msra.mxu0 %v2365
        %2409 = vmatpush.msra.mxu0 %v2364
        %2410 = vmatpush.msra.mxu0 %v2363
        %2411 = vmatmul.f32.gmra.mxu0 %v2373
        %v2412 = vpop.f32.mrf.mxu0
        %v2413 = vadd.f32 %v2393, %v2412
        %2414 = vdwg.mxu0
        %v2415 = vadd.f32 %v2345, %v2413
        %s2416 = scalar_lea.vmem [#allocation13], 1288
        %v2417 = vld [vmem:[%s2416] sm:$0xff]
        %v2418 = vld [vmem:[%s2416 + $0x8] sm:$0xff]
        %v2419 = vld [vmem:[%s2416 + $0x10] sm:$0xff]
        %v2420 = vld [vmem:[%s2416 + $0x18] sm:$0xff]
        %v2421 = vld [vmem:[%s2416 + $0x20] sm:$0xff]
        %v2422 = vld [vmem:[%s2416 + $0x28] sm:$0xff]
        %v2423 = vld [vmem:[%s2416 + $0x30] sm:$0xff]
        %v2424 = vld [vmem:[%s2416 + $0x38] sm:$0xff]
        %v2425 = vld [vmem:[%s2416 + $0x40] sm:$0xff]
        %v2426 = vld [vmem:[%s2416 + $0x48] sm:$0xff]
        %v2427 = vld [vmem:[%s2416 + $0x50] sm:$0xff]
        %v2428 = vld [vmem:[%s2416 + $0x58] sm:$0xff]
        %v2429 = vld [vmem:[%s2416 + $0x60] sm:$0xff]
        %v2430 = vld [vmem:[%s2416 + $0x68] sm:$0xff]
        %v2431 = vld [vmem:[%s2416 + $0x70] sm:$0xff]
        %v2432 = vld [vmem:[%s2416 + $0x78] sm:$0xff]
        %v2433 = vld [vmem:[%s2416 + $0x80] sm:$0xff]
        %v2434 = vld [vmem:[%s2416 + $0x88] sm:$0xff]
        %v2435 = vld [vmem:[%s2416 + $0x90] sm:$0xff]
        %v2436 = vld [vmem:[%s2416 + $0x98] sm:$0xff]
        %v2437 = vld [vmem:[%s2416 + $0xa0] sm:$0xff]
        %v2438 = vld [vmem:[%s2416 + $0xa8] sm:$0xff]
        %v2439 = vld [vmem:[%s2416 + $0xb0] sm:$0xff]
        %v2440 = vrot.slane %v2205, 6
        %v2441 = vrot.slane %v2206, 6
        %v2443 = vsel %vm1943, %v2441, 0
        %2445 = vmatpush.msra.mxu0 %v2432
        %2446 = vmatpush.msra.mxu0 %v2431
        %2447 = vmatpush.msra.mxu0 %v2430
        %2448 = vmatpush.msra.mxu0 %v2429
        %2449 = vmatpush.msra.mxu0 %v2428
        %2450 = vmatpush.msra.mxu0 %v2427
        %2451 = vmatpush.msra.mxu0 %v2426
        %2452 = vmatpush.msra.mxu0 %v2425
        %2453 = vmatpush.msra.mxu0 %v2424
        %2454 = vmatpush.msra.mxu0 %v2423
        %2455 = vmatpush.msra.mxu0 %v2422
        %2456 = vmatpush.msra.mxu0 %v2421
        %2457 = vmatpush.msra.mxu0 %v2420
        %2458 = vmatpush.msra.mxu0 %v2419
        %2459 = vmatpush.msra.mxu0 %v2418
        %2460 = vmatpush.msra.mxu0 %v2417
        %2461 = vmatmul.f32.gmra.mxu0 %v2440
        %v2462 = vpop.f32.mrf.mxu0
        %v2463 = vadd.f32 0.0, %v2462
        %2464 = vdwg.mxu0
        %2465 = vmatpush.msra.mxu0 0.0
        %2466 = vmatpush.msra.mxu0 0.0
        %2467 = vmatpush.msra.mxu0 0.0
        %2468 = vmatpush.msra.mxu0 0.0
        %2469 = vmatpush.msra.mxu0 0.0
        %2470 = vmatpush.msra.mxu0 0.0
        %2471 = vmatpush.msra.mxu0 0.0
        %2472 = vmatpush.msra.mxu0 0.0
        %2473 = vmatpush.msra.mxu0 0.0
        %2474 = vmatpush.msra.mxu0 %v2439
        %2475 = vmatpush.msra.mxu0 %v2438
        %2476 = vmatpush.msra.mxu0 %v2437
        %2477 = vmatpush.msra.mxu0 %v2436
        %2478 = vmatpush.msra.mxu0 %v2435
        %2479 = vmatpush.msra.mxu0 %v2434
        %2480 = vmatpush.msra.mxu0 %v2433
        %2481 = vmatmul.f32.gmra.mxu0 %v2443
        %v2482 = vpop.f32.mrf.mxu0
        %v2483 = vadd.f32 %v2463, %v2482
        %2484 = vdwg.mxu0
        %v2485 = vadd.f32 %v2415, %v2483
        %v2488 = vrot.slane %v1910, 1
        %v2489 = vrot.slane %v1911, 1
        %v2492 = vmax.f32 %v1910, %v2488
        %v2493 = vmax.f32 %v1911, %v2489
        %s2494 = scalar_lea.vmem [#allocation13], 1472
        %v2495 = vld [vmem:[%s2494] sm:$0xff]
        %v2496 = vld [vmem:[%s2494 + $0x8] sm:$0xff]
        %v2497 = vld [vmem:[%s2494 + $0x10] sm:$0xff]
        %v2498 = vld [vmem:[%s2494 + $0x18] sm:$0xff]
        %v2499 = vld [vmem:[%s2494 + $0x20] sm:$0xff]
        %v2500 = vld [vmem:[%s2494 + $0x28] sm:$0xff]
        %v2501 = vld [vmem:[%s2494 + $0x30] sm:$0xff]
        %v2502 = vld [vmem:[%s2494 + $0x38] sm:$0xff]
        %v2503 = vld [vmem:[%s2494 + $0x40] sm:$0xff]
        %v2504 = vld [vmem:[%s2494 + $0x48] sm:$0xff]
        %v2505 = vld [vmem:[%s2494 + $0x50] sm:$0xff]
        %v2506 = vld [vmem:[%s2494 + $0x58] sm:$0xff]
        %v2507 = vld [vmem:[%s2494 + $0x60] sm:$0xff]
        %v2508 = vld [vmem:[%s2494 + $0x68] sm:$0xff]
        %v2509 = vld [vmem:[%s2494 + $0x70] sm:$0xff]
        %v2510 = vld [vmem:[%s2494 + $0x78] sm:$0xff]
        %v2511 = vld [vmem:[%s2494 + $0x80] sm:$0xff]
        %v2512 = vld [vmem:[%s2494 + $0x88] sm:$0xff]
        %v2513 = vld [vmem:[%s2494 + $0x90] sm:$0xff]
        %v2514 = vld [vmem:[%s2494 + $0x98] sm:$0xff]
        %v2515 = vld [vmem:[%s2494 + $0xa0] sm:$0xff]
        %v2516 = vld [vmem:[%s2494 + $0xa8] sm:$0xff]
        %v2517 = vld [vmem:[%s2494 + $0xb0] sm:$0xff]
        %v2519 = vsel %vm1943, %v2493, 0
        %2521 = vmatpush.msra.mxu0 %v2510
        %2522 = vmatpush.msra.mxu0 %v2509
        %2523 = vmatpush.msra.mxu0 %v2508
        %2524 = vmatpush.msra.mxu0 %v2507
        %2525 = vmatpush.msra.mxu0 %v2506
        %2526 = vmatpush.msra.mxu0 %v2505
        %2527 = vmatpush.msra.mxu0 %v2504
        %2528 = vmatpush.msra.mxu0 %v2503
        %2529 = vmatpush.msra.mxu0 %v2502
        %2530 = vmatpush.msra.mxu0 %v2501
        %2531 = vmatpush.msra.mxu0 %v2500
        %2532 = vmatpush.msra.mxu0 %v2499
        %2533 = vmatpush.msra.mxu0 %v2498
        %2534 = vmatpush.msra.mxu0 %v2497
        %2535 = vmatpush.msra.mxu0 %v2496
        %2536 = vmatpush.msra.mxu0 %v2495
        %2537 = vmatmul.f32.gmra.mxu0 %v2492
        %v2538 = vpop.f32.mrf.mxu0
        %v2539 = vadd.f32 0.0, %v2538
        %2540 = vdwg.mxu0
        %2541 = vmatpush.msra.mxu0 0.0
        %2542 = vmatpush.msra.mxu0 0.0
        %2543 = vmatpush.msra.mxu0 0.0
        %2544 = vmatpush.msra.mxu0 0.0
        %2545 = vmatpush.msra.mxu0 0.0
        %2546 = vmatpush.msra.mxu0 0.0
        %2547 = vmatpush.msra.mxu0 0.0
        %2548 = vmatpush.msra.mxu0 0.0
        %2549 = vmatpush.msra.mxu0 0.0
        %2550 = vmatpush.msra.mxu0 %v2517
        %2551 = vmatpush.msra.mxu0 %v2516
        %2552 = vmatpush.msra.mxu0 %v2515
        %2553 = vmatpush.msra.mxu0 %v2514
        %2554 = vmatpush.msra.mxu0 %v2513
        %2555 = vmatpush.msra.mxu0 %v2512
        %2556 = vmatpush.msra.mxu0 %v2511
        %2557 = vmatmul.f32.gmra.mxu0 %v2519
        %v2558 = vpop.f32.mrf.mxu0
        %v2559 = vadd.f32 %v2539, %v2558
        %2560 = vdwg.mxu0
        %v2561 = vadd.f32 %v2485, %v2559
        %s2562 = scalar_lea.vmem [#allocation13], 1656
        %v2563 = vld [vmem:[%s2562] sm:$0xff]
        %v2564 = vld [vmem:[%s2562 + $0x8] sm:$0xff]
        %v2565 = vld [vmem:[%s2562 + $0x10] sm:$0xff]
        %v2566 = vld [vmem:[%s2562 + $0x18] sm:$0xff]
        %v2567 = vld [vmem:[%s2562 + $0x20] sm:$0xff]
        %v2568 = vld [vmem:[%s2562 + $0x28] sm:$0xff]
        %v2569 = vld [vmem:[%s2562 + $0x30] sm:$0xff]
        %v2570 = vld [vmem:[%s2562 + $0x38] sm:$0xff]
        %v2571 = vld [vmem:[%s2562 + $0x40] sm:$0xff]
        %v2572 = vld [vmem:[%s2562 + $0x48] sm:$0xff]
        %v2573 = vld [vmem:[%s2562 + $0x50] sm:$0xff]
        %v2574 = vld [vmem:[%s2562 + $0x58] sm:$0xff]
        %v2575 = vld [vmem:[%s2562 + $0x60] sm:$0xff]
        %v2576 = vld [vmem:[%s2562 + $0x68] sm:$0xff]
        %v2577 = vld [vmem:[%s2562 + $0x70] sm:$0xff]
        %v2578 = vld [vmem:[%s2562 + $0x78] sm:$0xff]
        %v2579 = vld [vmem:[%s2562 + $0x80] sm:$0xff]
        %v2580 = vld [vmem:[%s2562 + $0x88] sm:$0xff]
        %v2581 = vld [vmem:[%s2562 + $0x90] sm:$0xff]
        %v2582 = vld [vmem:[%s2562 + $0x98] sm:$0xff]
        %v2583 = vld [vmem:[%s2562 + $0xa0] sm:$0xff]
        %v2584 = vld [vmem:[%s2562 + $0xa8] sm:$0xff]
        %v2585 = vld [vmem:[%s2562 + $0xb0] sm:$0xff]
        %v2587 = vrot.slane %v2492, 2
        %v2588 = vrot.slane %v2493, 2
        %v2590 = vsel %vm1943, %v2588, 0
        %2592 = vmatpush.msra.mxu0 %v2578
        %2593 = vmatpush.msra.mxu0 %v2577
        %2594 = vmatpush.msra.mxu0 %v2576
        %2595 = vmatpush.msra.mxu0 %v2575
        %2596 = vmatpush.msra.mxu0 %v2574
        %2597 = vmatpush.msra.mxu0 %v2573
        %2598 = vmatpush.msra.mxu0 %v2572
        %2599 = vmatpush.msra.mxu0 %v2571
        %2600 = vmatpush.msra.mxu0 %v2570
        %2601 = vmatpush.msra.mxu0 %v2569
        %2602 = vmatpush.msra.mxu0 %v2568
        %2603 = vmatpush.msra.mxu0 %v2567
        %2604 = vmatpush.msra.mxu0 %v2566
        %2605 = vmatpush.msra.mxu0 %v2565
        %2606 = vmatpush.msra.mxu0 %v2564
        %2607 = vmatpush.msra.mxu0 %v2563
        %2608 = vmatmul.f32.gmra.mxu0 %v2587
        %v2609 = vpop.f32.mrf.mxu0
        %v2610 = vadd.f32 0.0, %v2609
        %2611 = vdwg.mxu0
        %2612 = vmatpush.msra.mxu0 0.0
        %2613 = vmatpush.msra.mxu0 0.0
        %2614 = vmatpush.msra.mxu0 0.0
        %2615 = vmatpush.msra.mxu0 0.0
        %2616 = vmatpush.msra.mxu0 0.0
        %2617 = vmatpush.msra.mxu0 0.0
        %2618 = vmatpush.msra.mxu0 0.0
        %2619 = vmatpush.msra.mxu0 0.0
        %2620 = vmatpush.msra.mxu0 0.0
        %2621 = vmatpush.msra.mxu0 %v2585
        %2622 = vmatpush.msra.mxu0 %v2584
        %2623 = vmatpush.msra.mxu0 %v2583
        %2624 = vmatpush.msra.mxu0 %v2582
        %2625 = vmatpush.msra.mxu0 %v2581
        %2626 = vmatpush.msra.mxu0 %v2580
        %2627 = vmatpush.msra.mxu0 %v2579
        %2628 = vmatmul.f32.gmra.mxu0 %v2590
        %v2629 = vpop.f32.mrf.mxu0
        %v2630 = vadd.f32 %v2610, %v2629
        %2631 = vdwg.mxu0
        %v2632 = vadd.f32 %v2561, %v2630
        %s2633 = scalar_lea.vmem [#allocation13], 1840
        %v2634 = vld [vmem:[%s2633] sm:$0xff]
        %v2635 = vld [vmem:[%s2633 + $0x8] sm:$0xff]
        %v2636 = vld [vmem:[%s2633 + $0x10] sm:$0xff]
        %v2637 = vld [vmem:[%s2633 + $0x18] sm:$0xff]
        %v2638 = vld [vmem:[%s2633 + $0x20] sm:$0xff]
        %v2639 = vld [vmem:[%s2633 + $0x28] sm:$0xff]
        %v2640 = vld [vmem:[%s2633 + $0x30] sm:$0xff]
        %v2641 = vld [vmem:[%s2633 + $0x38] sm:$0xff]
        %v2642 = vld [vmem:[%s2633 + $0x40] sm:$0xff]
        %v2643 = vld [vmem:[%s2633 + $0x48] sm:$0xff]
        %v2644 = vld [vmem:[%s2633 + $0x50] sm:$0xff]
        %v2645 = vld [vmem:[%s2633 + $0x58] sm:$0xff]
        %v2646 = vld [vmem:[%s2633 + $0x60] sm:$0xff]
        %v2647 = vld [vmem:[%s2633 + $0x68] sm:$0xff]
        %v2648 = vld [vmem:[%s2633 + $0x70] sm:$0xff]
        %v2649 = vld [vmem:[%s2633 + $0x78] sm:$0xff]
        %v2650 = vld [vmem:[%s2633 + $0x80] sm:$0xff]
        %v2651 = vld [vmem:[%s2633 + $0x88] sm:$0xff]
        %v2652 = vld [vmem:[%s2633 + $0x90] sm:$0xff]
        %v2653 = vld [vmem:[%s2633 + $0x98] sm:$0xff]
        %v2654 = vld [vmem:[%s2633 + $0xa0] sm:$0xff]
        %v2655 = vld [vmem:[%s2633 + $0xa8] sm:$0xff]
        %v2656 = vld [vmem:[%s2633 + $0xb0] sm:$0xff]
        %v2657 = vrot.slane %v2492, 4
        %v2658 = vrot.slane %v2493, 4
        %v2660 = vsel %vm1943, %v2658, 0
        %2662 = vmatpush.msra.mxu0 %v2649
        %2663 = vmatpush.msra.mxu0 %v2648
        %2664 = vmatpush.msra.mxu0 %v2647
        %2665 = vmatpush.msra.mxu0 %v2646
        %2666 = vmatpush.msra.mxu0 %v2645
        %2667 = vmatpush.msra.mxu0 %v2644
        %2668 = vmatpush.msra.mxu0 %v2643
        %2669 = vmatpush.msra.mxu0 %v2642
        %2670 = vmatpush.msra.mxu0 %v2641
        %2671 = vmatpush.msra.mxu0 %v2640
        %2672 = vmatpush.msra.mxu0 %v2639
        %2673 = vmatpush.msra.mxu0 %v2638
        %2674 = vmatpush.msra.mxu0 %v2637
        %2675 = vmatpush.msra.mxu0 %v2636
        %2676 = vmatpush.msra.mxu0 %v2635
        %2677 = vmatpush.msra.mxu0 %v2634
        %2678 = vmatmul.f32.gmra.mxu0 %v2657
        %v2679 = vpop.f32.mrf.mxu0
        %v2680 = vadd.f32 0.0, %v2679
        %2681 = vdwg.mxu0
        %2682 = vmatpush.msra.mxu0 0.0
        %2683 = vmatpush.msra.mxu0 0.0
        %2684 = vmatpush.msra.mxu0 0.0
        %2685 = vmatpush.msra.mxu0 0.0
        %2686 = vmatpush.msra.mxu0 0.0
        %2687 = vmatpush.msra.mxu0 0.0
        %2688 = vmatpush.msra.mxu0 0.0
        %2689 = vmatpush.msra.mxu0 0.0
        %2690 = vmatpush.msra.mxu0 0.0
        %2691 = vmatpush.msra.mxu0 %v2656
        %2692 = vmatpush.msra.mxu0 %v2655
        %2693 = vmatpush.msra.mxu0 %v2654
        %2694 = vmatpush.msra.mxu0 %v2653
        %2695 = vmatpush.msra.mxu0 %v2652
        %2696 = vmatpush.msra.mxu0 %v2651
        %2697 = vmatpush.msra.mxu0 %v2650
        %2698 = vmatmul.f32.gmra.mxu0 %v2660
        %v2699 = vpop.f32.mrf.mxu0
        %v2700 = vadd.f32 %v2680, %v2699
        %2701 = vdwg.mxu0
        %v2702 = vadd.f32 %v2632, %v2700
        %s2703 = scalar_lea.vmem [#allocation13], 2024
        %v2704 = vld [vmem:[%s2703] sm:$0xff]
        %v2705 = vld [vmem:[%s2703 + $0x8] sm:$0xff]
        %v2706 = vld [vmem:[%s2703 + $0x10] sm:$0xff]
        %v2707 = vld [vmem:[%s2703 + $0x18] sm:$0xff]
        %v2708 = vld [vmem:[%s2703 + $0x20] sm:$0xff]
        %v2709 = vld [vmem:[%s2703 + $0x28] sm:$0xff]
        %v2710 = vld [vmem:[%s2703 + $0x30] sm:$0xff]
        %v2711 = vld [vmem:[%s2703 + $0x38] sm:$0xff]
        %v2712 = vld [vmem:[%s2703 + $0x40] sm:$0xff]
        %v2713 = vld [vmem:[%s2703 + $0x48] sm:$0xff]
        %v2714 = vld [vmem:[%s2703 + $0x50] sm:$0xff]
        %v2715 = vld [vmem:[%s2703 + $0x58] sm:$0xff]
        %v2716 = vld [vmem:[%s2703 + $0x60] sm:$0xff]
        %v2717 = vld [vmem:[%s2703 + $0x68] sm:$0xff]
        %v2718 = vld [vmem:[%s2703 + $0x70] sm:$0xff]
        %v2719 = vld [vmem:[%s2703 + $0x78] sm:$0xff]
        %v2720 = vld [vmem:[%s2703 + $0x80] sm:$0xff]
        %v2721 = vld [vmem:[%s2703 + $0x88] sm:$0xff]
        %v2722 = vld [vmem:[%s2703 + $0x90] sm:$0xff]
        %v2723 = vld [vmem:[%s2703 + $0x98] sm:$0xff]
        %v2724 = vld [vmem:[%s2703 + $0xa0] sm:$0xff]
        %v2725 = vld [vmem:[%s2703 + $0xa8] sm:$0xff]
        %v2726 = vld [vmem:[%s2703 + $0xb0] sm:$0xff]
        %v2727 = vrot.slane %v2492, 6
        %v2728 = vrot.slane %v2493, 6
        %v2730 = vsel %vm1943, %v2728, 0
        %2732 = vmatpush.msra.mxu0 %v2719
        %2733 = vmatpush.msra.mxu0 %v2718
        %2734 = vmatpush.msra.mxu0 %v2717
        %2735 = vmatpush.msra.mxu0 %v2716
        %2736 = vmatpush.msra.mxu0 %v2715
        %2737 = vmatpush.msra.mxu0 %v2714
        %2738 = vmatpush.msra.mxu0 %v2713
        %2739 = vmatpush.msra.mxu0 %v2712
        %2740 = vmatpush.msra.mxu0 %v2711
        %2741 = vmatpush.msra.mxu0 %v2710
        %2742 = vmatpush.msra.mxu0 %v2709
        %2743 = vmatpush.msra.mxu0 %v2708
        %2744 = vmatpush.msra.mxu0 %v2707
        %2745 = vmatpush.msra.mxu0 %v2706
        %2746 = vmatpush.msra.mxu0 %v2705
        %2747 = vmatpush.msra.mxu0 %v2704
        %2748 = vmatmul.f32.gmra.mxu0 %v2727
        %v2749 = vpop.f32.mrf.mxu0
        %v2750 = vadd.f32 0.0, %v2749
        %2751 = vdwg.mxu0
        %2752 = vmatpush.msra.mxu0 0.0
        %2753 = vmatpush.msra.mxu0 0.0
        %2754 = vmatpush.msra.mxu0 0.0
        %2755 = vmatpush.msra.mxu0 0.0
        %2756 = vmatpush.msra.mxu0 0.0
        %2757 = vmatpush.msra.mxu0 0.0
        %2758 = vmatpush.msra.mxu0 0.0
        %2759 = vmatpush.msra.mxu0 0.0
        %2760 = vmatpush.msra.mxu0 0.0
        %2761 = vmatpush.msra.mxu0 %v2726
        %2762 = vmatpush.msra.mxu0 %v2725
        %2763 = vmatpush.msra.mxu0 %v2724
        %2764 = vmatpush.msra.mxu0 %v2723
        %2765 = vmatpush.msra.mxu0 %v2722
        %2766 = vmatpush.msra.mxu0 %v2721
        %2767 = vmatpush.msra.mxu0 %v2720
        %2768 = vmatmul.f32.gmra.mxu0 %v2730
        %v2769 = vpop.f32.mrf.mxu0
        %v2770 = vadd.f32 %v2750, %v2769
        %2771 = vdwg.mxu0
        %v2772 = vadd.f32 %v2702, %v2770
        %2773 = vst [vmem:[%s449] sm:$0x1] %v2772
        %s2774 = sand.u32 %s230, 1
        %s2775 = scalar_lea.sflag [#allocation4], %s2774
        %s2776 = sand.u32 %s230, 1
        %s2777 = scalar_lea.vmem [#allocation16], %s2776
        // Predicated region
        $region89: #{forward.1} parent=55 // pred_check
          %p2778 = pneg %p240
        $region90: #{forward.1} parent=55 // pred_check_branch
          %2780 = sbr.rel (%p2778) target = $region92
        $region91: #{forward.1} parent=55 // pred_region
          %2782 = vsyncadd %s2775, 0
          %s2783 = scalar_lea.hbm %s9, %s28
          %s2785 = sshll.u32 %s2777, 4
          %s2786 = int_to_ptr.vmem [resolvable:$true] %s2785
          %s2787 = sshll.u32 %s2783, 4
          %s2788 = int_to_ptr.hbm [resolvable:$true] %s2787
          %2790 = dma.vmem_to_hbm [thread:$0]  %s2786, 16, %s2788, %s2775
        $region92: #{forward.1} parent=55 // pred_fallthru
          _
      $region56: #{forward.1} parent=5 // pred_fallthru
        _
      %p2791 = scmp.le.s32.totalorder 2, %s23
      // Predicated region
      $region93: #{forward.1} parent=5 // pred_check
        %p2792 = pneg %p2791
      $region94: #{forward.1} parent=5 // pred_check_branch
        %2794 = sbr.rel (%p2792) target = $region96
      $region95: #{forward.1} parent=5 // pred_region
        %s2795 = ssub.s32 %s23, 2
        // Predicated region
        $region97: #{forward.1} parent=95 // pred_check
          %p2796 = pneg %p246
        $region98: #{forward.1} parent=95 // pred_check_branch
          %2798 = sbr.rel (%p2796) target = $region100
        $region99: #{forward.1} parent=95 // pred_region
          %s2799 = sand.u32 %s231, 1
          %s2800 = scalar_lea.sflag [#allocation4], %s2799
          %s2801 = sand.u32 %s231, 1
          %s2802 = scalar_lea.vmem [#allocation16], %s2801
          %2804 = dma.done %s2800, 16
        $region100: #{forward.1} parent=95 // pred_fallthru
          _
      $region96: #{forward.1} parent=5 // pred_fallthru
        _
    $region6: #{forward.1} parent=1 // loop_footer
      %s27 = sadd.s32 1, %s23
    $region7: #{forward.1} parent=1 // loop_footer_branch
      %22 = sbr.rel target = $region3
    $region8: #{forward.1} parent=1 // loop_exit
      _
    %2805 = vsyncpa [#allocation3], 1
    %s2806 = scalar_lea.sflag [#allocation3], 1
    %2807 = vsyncpa %s2806, 1
    %2808 = vsyncpa [#allocation6], 1
    %2809 = vsyncpa [#allocation9], 1
    %2810 = vsyncpa [#allocation12], 1
    %2811 = vsyncpa [#allocation15], 1
    %2812 = vsyncpa [#allocation4], 1
    %s2813 = scalar_lea.sflag [#allocation4], 1
    %2814 = vsyncpa %s2813, 1

</llo_original>
